<compile_context>
chip_gen: v5e
topology: v5e:2x2
jax: 0.10.0
libtpu: 0.0.40
codegen_flags: <defaults>
</compile_context>

<pallas_src>
import functools

import jax
import jax.numpy as jnp
from jax.experimental import pallas as pl
from jax.experimental.pallas import tpu as pltpu

BN_EPS = 1e-5


# ----------------------------------------------------------------------------
# Fused kernel: expand(1x1)+BN+ReLU6 -> dw(3x3,s)+BN+ReLU6 -> proj(1x1)+BN (+res)
# ----------------------------------------------------------------------------
def _fused_ir_kernel(*refs, th, s_in, stride, H, W, w_out, hidden,
                     has_expand, use_res):
    it = iter(refs)
    x_ref = next(it)                       # (1, H+2, W+2, cin) padded NHWC input
    if has_expand:
        w_exp_ref = next(it)               # (cin, hidden)   BN1 scale folded in
        b1_ref = next(it)                  # (1, hidden)
    w_dw_ref = next(it)                    # (3, 3, hidden)  BN2 scale folded in
    b2_ref = next(it)                      # (1, hidden)
    w_projt_ref = next(it)                 # (oup, hidden)   BN3 scale folded in
    b3_ref = next(it)                      # (oup, 1)
    res_ref = next(it) if use_res else None  # (1, oup, th*w_out) NCHW residual
    o_ref = next(it)                       # (1, oup, th*w_out) NCHW output tile

    r = pl.program_id(1)
    r0 = pl.multiple_of(r * (th * stride), th * stride)  # first padded row of stripe
    wp = W + 2
    cin = x_ref.shape[3]

    # Rows of the padded input needed for `th` output rows (3x3 halo included).
    x_stripe = x_ref[0, pl.ds(r0, s_in), :, :]           # (s_in, W+2, cin)

    # ---- 1x1 expand + BN + ReLU6 (MXU); hidden stripe stays in VMEM ----
    if has_expand:
        x2d = x_stripe.reshape(s_in * wp, cin)
        h2d = jnp.dot(x2d, w_exp_ref[...], preferred_element_type=jnp.float32)
        h2d = jnp.clip(h2d + b1_ref[...], 0.0, 6.0)
        hval = h2d.reshape(s_in, wp, hidden)
        # Padded-zero positions went through conv+BN+ReLU6 and became
        # relu6(bias) != 0; restore exact zero padding for the depthwise conv.
        rows = jax.lax.broadcasted_iota(jnp.int32, (s_in, wp, 1), 0) + r0
        cols = jax.lax.broadcasted_iota(jnp.int32, (s_in, wp, 1), 1)
        halo = (rows == 0) | (rows == H + 1) | (cols == 0) | (cols == W + 1)
        hval = jnp.where(halo, 0.0, hval)
    else:
        hval = x_stripe.astype(jnp.float32)

    # ---- 3x3 depthwise + BN + ReLU6 (VPU); stride applied directly ----
    wdw = w_dw_ref[...]
    acc = jnp.zeros((th, w_out, hidden), jnp.float32)
    for kh in range(3):
        for kw in range(3):
            win = hval[kh: kh + stride * (th - 1) + 1: stride,
                       kw: kw + stride * (w_out - 1) + 1: stride, :]
            acc = acc + win * wdw[kh, kw:kw + 1, :]
    dw = jnp.clip(acc + b2_ref[...], 0.0, 6.0)

    # ---- 1x1 project + BN (+ residual), emitted channel-major ----
    # Result is (oup, th*w_out): lane-dense stores and already NCHW layout,
    # so no output transpose is needed in the wrapper.
    dw2d = dw.reshape(th * w_out, hidden)
    out_cm = jax.lax.dot_general(
        w_projt_ref[...], dw2d,
        dimension_numbers=(((1,), (1,)), ((), ())),
        preferred_element_type=jnp.float32)              # (oup, th*w_out)
    out_cm = out_cm + b3_ref[...]
    if use_res:
        out_cm = out_cm + res_ref[0].astype(jnp.float32)
    o_ref[0] = out_cm.astype(o_ref.dtype)


# ----------------------------------------------------------------------------
# Wrapper
# ----------------------------------------------------------------------------
def _pick_stripe_height(h_out, w_out, w_in, hidden, stride,
                        budget_bytes=2 * 1024 * 1024):
    """Largest output-row stripe height that (a) divides h_out, (b) keeps the
    f32 hidden stripe under ~budget_bytes, and (c) keeps the flattened output
    tile a multiple of 128 lanes.  Falls back to the whole image (always legal,
    since the block then equals the full output extent)."""
    per_row = stride * (w_in + 2) * hidden * 4   # hidden-stripe bytes per out row
    max_rows = max(1, budget_bytes // max(per_row, 1))
    best = None
    for th in range(1, h_out):
        if h_out % th or th > max_rows:
            continue
        if (th * w_out) % 128:
            continue
        best = th                                 # ascending loop -> keeps largest
    return best if best is not None else h_out


def inverted_residual_forward(x_nchw, params, *, inp, oup, stride, expand_ratio):
    assert stride in (1, 2)
    use_res = (stride == 1) and (inp == oup)
    has_expand = expand_ratio != 1
    N, C, H, W = x_nchw.shape
    assert C == inp
    hidden = int(round(inp * expand_ratio))
    h_out = (H - 1) // stride + 1
    w_out = (W - 1) // stride + 1

    # NCHW -> NHWC + zero pad, once, on the cheap pre-expansion tensor only.
    x_pad = jnp.pad(jnp.transpose(x_nchw, (0, 2, 3, 1)),
                    ((0, 0), (1, 1), (1, 1), (0, 0)))

    # Fold eval-mode BN scales into the conv weights (biases stay separate).
    if has_expand:
        w_exp = params["w_expand"] * params["bn1_scale"][None, :]
        b1 = params["bn1_bias"].reshape(1, hidden)
    w_dw = params["w_dw"] * params["bn2_scale"][None, None, :]
    b2 = params["bn2_bias"].reshape(1, hidden)
    w_projt = (params["w_proj"] * params["bn3_scale"][None, :]).T   # (oup, hidden)
    b3 = params["bn3_bias"].reshape(oup, 1)

    th = _pick_stripe_height(h_out, w_out, W, hidden, stride)
    n_stripes = h_out // th
    s_in = stride * (th - 1) + 3       # padded input rows needed per stripe

    kernel = functools.partial(
        _fused_ir_kernel, th=th, s_in=s_in, stride=stride, H=H, W=W,
        w_out=w_out, hidden=hidden, has_expand=has_expand, use_res=use_res)

    # Per-batch padded input block: constant index across stripes -> DMAed once
    # per batch and reused from VMEM by every stripe.
    in_specs = [pl.BlockSpec((1, H + 2, W + 2, inp), lambda n, r: (n, 0, 0, 0))]
    args = [x_pad]
    if has_expand:
        in_specs += [pl.BlockSpec((inp, hidden), lambda n, r: (0, 0)),
                     pl.BlockSpec((1, hidden), lambda n, r: (0, 0))]
        args += [w_exp, b1]
    in_specs += [pl.BlockSpec((3, 3, hidden), lambda n, r: (0, 0, 0)),
                 pl.BlockSpec((1, hidden), lambda n, r: (0, 0)),
                 pl.BlockSpec((oup, hidden), lambda n, r: (0, 0)),
                 pl.BlockSpec((oup, 1), lambda n, r: (0, 0))]
    args += [w_dw, b2, w_projt, b3]
    if use_res:
        # Residual consumed directly in NCHW (channel-major), matching the
        # kernel's output layout -> no in-kernel transpose for the residual.
        in_specs.append(pl.BlockSpec((1, oup, th * w_out), lambda n, r: (n, 0, r)))
        args.append(x_nchw.reshape(N, inp, H * W))

    out = pl.pallas_call(
        kernel,
        grid=(N, n_stripes),
        in_specs=in_specs,
        out_specs=pl.BlockSpec((1, oup, th * w_out), lambda n, r: (n, 0, r)),
        out_shape=jax.ShapeDtypeStruct((N, oup, h_out * w_out), x_nchw.dtype),
        compiler_params=pltpu.CompilerParams(
            dimension_semantics=("parallel", "parallel"),
            vmem_limit_bytes=48 * 1024 * 1024),   # fits v5e/v6e/v7x physical VMEM
    )(*args)
    # Trailing-dim split only: layout-preserving, effectively free.
    return out.reshape(N, oup, h_out, w_out)


# ----------------------------------------------------------------------------
# Parameter construction (deterministic, eval-mode BN folded to scale/bias)
# ----------------------------------------------------------------------------
def _fold_bn(key, c):
    kg, kb, km, kv = jax.random.split(key, 4)
    gamma = jax.random.uniform(kg, (c,), jnp.float32, 0.5, 1.5)
    beta = jax.random.normal(kb, (c,), jnp.float32) * 0.1
    mean = jax.random.normal(km, (c,), jnp.float32) * 0.1
    var = jax.random.uniform(kv, (c,), jnp.float32, 0.5, 1.5)
    scale = gamma / jnp.sqrt(var + BN_EPS)
    bias = beta - mean * scale
    return scale, bias


def init_inverted_residual_params(key, inp, oup, expand_ratio):
    hidden = int(round(inp * expand_ratio))
    keys = jax.random.split(key, 6)
    params = {}
    if expand_ratio != 1:
        # expand 1x1 conv: PyTorch (hidden, inp, 1, 1) -> ours (inp, hidden)
        params["w_expand"] = jax.random.normal(keys[0], (inp, hidden), jnp.float32) * 0.1
        params["bn1_scale"], params["bn1_bias"] = _fold_bn(keys[1], hidden)
    # depthwise 3x3 conv: PyTorch (hidden, 1, 3, 3) -> ours (3, 3, hidden)
    params["w_dw"] = jax.random.normal(keys[2], (3, 3, hidden), jnp.float32) * 0.1
    params["bn2_scale"], params["bn2_bias"] = _fold_bn(keys[3], hidden)
    # project 1x1 conv: PyTorch (oup, hidden, 1, 1) -> ours (hidden, oup)
    params["w_proj"] = jax.random.normal(keys[4], (hidden, oup), jnp.float32) * 0.1
    params["bn3_scale"], params["bn3_bias"] = _fold_bn(keys[5], oup)
    return params


# ----------------------------------------------------------------------------
# Pure-JAX reference (mirrors InvertedResidual.forward, eval-mode BN)
# ----------------------------------------------------------------------------
def _reference_forward(x_nchw, params, *, inp, oup, stride, expand_ratio):
    x = jnp.transpose(x_nchw, (0, 2, 3, 1)).astype(jnp.float32)
    hidden = int(round(inp * expand_ratio))
    if expand_ratio != 1:
        h = jnp.einsum("nhwc,cd->nhwd", x, params["w_expand"])
        h = jnp.clip(h * params["bn1_scale"] + params["bn1_bias"], 0.0, 6.0)
    else:
        h = x
    hp = jnp.pad(h, ((0, 0), (1, 1), (1, 1), (0, 0)))
    N, H, W, _ = x.shape
    h_out = (H - 1) // stride + 1
    w_out = (W - 1) // stride + 1
    acc = jnp.zeros((N, h_out, w_out, hidden), jnp.float32)
    for kh in range(3):
        for kw in range(3):
            acc = acc + hp[:, kh: kh + stride * (h_out - 1) + 1: stride,
                           kw: kw + stride * (w_out - 1) + 1: stride, :] \
                        * params["w_dw"][kh, kw]
    dw = jnp.clip(acc * params["bn2_scale"] + params["bn2_bias"], 0.0, 6.0)
    out = jnp.einsum("nhwc,cd->nhwd", dw, params["w_proj"])
    out = out * params["bn3_scale"] + params["bn3_bias"]
    if stride == 1 and inp == oup:
        out = out + x
    return jnp.transpose(out, (0, 3, 1, 2))


if __name__ == "__main__":
    key = jax.random.PRNGKey(0)
    k_x, k_p = jax.random.split(key)

    # batch=2, inp=oup=8, 16x16 spatial, expand_ratio=4 (stride=1, inp==oup
    # => residual connection exercised).  Stripe picker -> TH=8, grid=(2, 2).
    inp, oup, stride, expand_ratio = 8, 8, 1, 4
    x = jax.random.normal(k_x, (2, inp, 16, 16), jnp.float32)   # NCHW, like PyTorch
    params = init_inverted_residual_params(k_p, inp, oup, expand_ratio)

    out = inverted_residual_forward(
        x, params, inp=inp, oup=oup, stride=stride, expand_ratio=expand_ratio)
    jax.block_until_ready(out)
    assert out.shape == (2, oup, 16, 16)

    ref = _reference_forward(
        x, params, inp=inp, oup=oup, stride=stride, expand_ratio=expand_ratio)
    assert jnp.allclose(out, ref, atol=1e-3, rtol=1e-3), \
        float(jnp.max(jnp.abs(out - ref)))
    print("KERNEL_OK")
</pallas_src>

<mosaic_0001>
module attributes {stable_mosaic.version = 11 : i64} {
  func.func @_fused_ir_kernel(%arg0: i32, %arg1: i32, %arg2: memref<1x18x18x8xf32, #tpu.memory_space<vmem>>, %arg3: memref<8x32xf32, #tpu.memory_space<vmem>>, %arg4: memref<1x32xf32, #tpu.memory_space<vmem>>, %arg5: memref<3x3x32xf32, #tpu.memory_space<vmem>>, %arg6: memref<1x32xf32, #tpu.memory_space<vmem>>, %arg7: memref<8x32xf32, #tpu.memory_space<vmem>>, %arg8: memref<8x1xf32, #tpu.memory_space<vmem>>, %arg9: memref<1x8x128xf32, #tpu.memory_space<vmem>>, %arg10: memref<1x8x128xf32, #tpu.memory_space<vmem>>) attributes {dimension_semantics = [#tpu.dimension_semantics<parallel>, #tpu.dimension_semantics<parallel>], iteration_bounds = array<i64: 2, 2>, scalar_prefetch = 0 : i64, scratch_operands = 0 : i64, tpu.core_type = #tpu.core_type<tc>, window_params = [{transform_indices = @transform_0, window_bounds = array<i64: 1, 18, 18, 8>}, {pipeline_mode = #tpu.pipeline_mode<synchronous>, transform_indices = @transform_1, window_bounds = array<i64: 8, 32>}, {pipeline_mode = #tpu.pipeline_mode<synchronous>, transform_indices = @transform_2, window_bounds = array<i64: 1, 32>}, {pipeline_mode = #tpu.pipeline_mode<synchronous>, transform_indices = @transform_3, window_bounds = array<i64: 3, 3, 32>}, {pipeline_mode = #tpu.pipeline_mode<synchronous>, transform_indices = @transform_4, window_bounds = array<i64: 1, 32>}, {pipeline_mode = #tpu.pipeline_mode<synchronous>, transform_indices = @transform_5, window_bounds = array<i64: 8, 32>}, {pipeline_mode = #tpu.pipeline_mode<synchronous>, transform_indices = @transform_6, window_bounds = array<i64: 8, 1>}, {transform_indices = @transform_7, window_bounds = array<i64: 1, 8, 128>}, {transform_indices = @transform_8, window_bounds = array<i64: 1, 8, 128>}]} {
    %c8_i32 = arith.constant 8 : i32
    %0 = arith.muli %arg1, %c8_i32 : i32
    %1 = tpu.assume_multiple %0, 8 : i32
    %c0 = arith.constant 0 : index
    %2 = arith.index_cast %1 : i32 to index
    %c0_0 = arith.constant 0 : index
    %c0_1 = arith.constant 0 : index
    %3 = vector.load %arg2[%c0, %2, %c0_0, %c0_1] : memref<1x18x18x8xf32, #tpu.memory_space<vmem>>, vector<1x10x18x8xf32>
    %4 = vector.shape_cast %3 : vector<1x10x18x8xf32> to vector<10x18x8xf32>
    %5 = vector.shape_cast %4 : vector<10x18x8xf32> to vector<180x8xf32>
    %c0_2 = arith.constant 0 : index
    %c0_3 = arith.constant 0 : index
    %6 = vector.load %arg3[%c0_2, %c0_3] : memref<8x32xf32, #tpu.memory_space<vmem>>, vector<8x32xf32>
    %cst = arith.constant dense<0.000000e+00> : vector<180x32xf32>
    %7 = tpu.matmul %5, %6, %cst {dimension_numbers = #tpu.dot_dimension_numbers<[1], [0], [0], [1], [0, 0, 1, 1], [], []>} : vector<180x8xf32>, vector<8x32xf32>, vector<180x32xf32> -> vector<180x32xf32>
    %c0_4 = arith.constant 0 : index
    %c0_5 = arith.constant 0 : index
    %8 = vector.load %arg4[%c0_4, %c0_5] : memref<1x32xf32, #tpu.memory_space<vmem>>, vector<1x32xf32>
    %9 = vector.broadcast %8 : vector<1x32xf32> to vector<180x32xf32>
    %10 = arith.addf %7, %9 : vector<180x32xf32>
    %cst_6 = arith.constant 0.000000e+00 : f32
    %cst_7 = arith.constant 6.000000e+00 : f32
    %11 = vector.broadcast %cst_6 : f32 to vector<180x32xf32>
    %12 = arith.maximumf %11, %10 : vector<180x32xf32>
    %13 = vector.broadcast %cst_7 : f32 to vector<180x32xf32>
    %14 = arith.minimumf %13, %12 : vector<180x32xf32>
    %15 = vector.shape_cast %14 : vector<180x32xf32> to vector<10x18x32xf32>
    %16 = tpu.iota {dimensions = array<i32: 0>} : vector<10x18x1xi32>
    %17 = vector.broadcast %1 : i32 to vector<10x18x1xi32>
    %18 = arith.addi %16, %17 : vector<10x18x1xi32>
    %19 = tpu.iota {dimensions = array<i32: 1>} : vector<10x18x1xi32>
    %c0_i32 = arith.constant 0 : i32
    %20 = vector.broadcast %c0_i32 : i32 to vector<10x18x1xi32>
    %21 = arith.cmpi eq, %18, %20 : vector<10x18x1xi32>
    %c17_i32 = arith.constant 17 : i32
    %22 = vector.broadcast %c17_i32 : i32 to vector<10x18x1xi32>
    %23 = arith.cmpi eq, %18, %22 : vector<10x18x1xi32>
    %24 = arith.ori %21, %23 : vector<10x18x1xi1>
    %c0_i32_8 = arith.constant 0 : i32
    %25 = vector.broadcast %c0_i32_8 : i32 to vector<10x18x1xi32>
    %26 = arith.cmpi eq, %19, %25 : vector<10x18x1xi32>
    %27 = arith.ori %24, %26 : vector<10x18x1xi1>
    %c17_i32_9 = arith.constant 17 : i32
    %28 = vector.broadcast %c17_i32_9 : i32 to vector<10x18x1xi32>
    %29 = arith.cmpi eq, %19, %28 : vector<10x18x1xi32>
    %30 = arith.ori %27, %29 : vector<10x18x1xi1>
    %cst_10 = arith.constant 0.000000e+00 : f32
    %31 = vector.shape_cast %30 : vector<10x18x1xi1> to vector<10x18x1xi1>
    %32 = vector.broadcast %31 : vector<10x18x1xi1> to vector<10x18x32xi1>
    %33 = vector.broadcast %cst_10 : f32 to vector<10x18x32xf32>
    %34 = arith.select %32, %33, %15 : vector<10x18x32xi1>, vector<10x18x32xf32>
    %c0_11 = arith.constant 0 : index
    %c0_12 = arith.constant 0 : index
    %c0_13 = arith.constant 0 : index
    %35 = vector.load %arg5[%c0_11, %c0_12, %c0_13] : memref<3x3x32xf32, #tpu.memory_space<vmem>>, vector<3x3x32xf32>
    %cst_14 = arith.constant 0.000000e+00 : f32
    %36 = vector.broadcast %cst_14 : f32 to vector<8x16x32xf32>
    %37 = vector.extract_strided_slice %34 {offsets = [0, 0, 0], sizes = [8, 16, 32], strides = [1, 1, 1]} : vector<10x18x32xf32> to vector<8x16x32xf32>
    %38 = vector.extract_strided_slice %35 {offsets = [0, 0, 0], sizes = [1, 1, 32], strides = [1, 1, 1]} : vector<3x3x32xf32> to vector<1x1x32xf32>
    %39 = vector.shape_cast %38 : vector<1x1x32xf32> to vector<1x32xf32>
    %40 = vector.shape_cast %39 : vector<1x32xf32> to vector<1x1x32xf32>
    %41 = vector.broadcast %40 : vector<1x1x32xf32> to vector<8x16x32xf32>
    %42 = arith.mulf %37, %41 : vector<8x16x32xf32>
    %43 = arith.addf %36, %42 : vector<8x16x32xf32>
    %44 = vector.extract_strided_slice %34 {offsets = [0, 1, 0], sizes = [8, 16, 32], strides = [1, 1, 1]} : vector<10x18x32xf32> to vector<8x16x32xf32>
    %45 = vector.extract_strided_slice %35 {offsets = [0, 1, 0], sizes = [1, 1, 32], strides = [1, 1, 1]} : vector<3x3x32xf32> to vector<1x1x32xf32>
    %46 = vector.shape_cast %45 : vector<1x1x32xf32> to vector<1x32xf32>
    %47 = vector.shape_cast %46 : vector<1x32xf32> to vector<1x1x32xf32>
    %48 = vector.broadcast %47 : vector<1x1x32xf32> to vector<8x16x32xf32>
    %49 = arith.mulf %44, %48 : vector<8x16x32xf32>
    %50 = arith.addf %43, %49 : vector<8x16x32xf32>
    %51 = vector.extract_strided_slice %34 {offsets = [0, 2, 0], sizes = [8, 16, 32], strides = [1, 1, 1]} : vector<10x18x32xf32> to vector<8x16x32xf32>
    %52 = vector.extract_strided_slice %35 {offsets = [0, 2, 0], sizes = [1, 1, 32], strides = [1, 1, 1]} : vector<3x3x32xf32> to vector<1x1x32xf32>
    %53 = vector.shape_cast %52 : vector<1x1x32xf32> to vector<1x32xf32>
    %54 = vector.shape_cast %53 : vector<1x32xf32> to vector<1x1x32xf32>
    %55 = vector.broadcast %54 : vector<1x1x32xf32> to vector<8x16x32xf32>
    %56 = arith.mulf %51, %55 : vector<8x16x32xf32>
    %57 = arith.addf %50, %56 : vector<8x16x32xf32>
    %58 = vector.extract_strided_slice %34 {offsets = [1, 0, 0], sizes = [8, 16, 32], strides = [1, 1, 1]} : vector<10x18x32xf32> to vector<8x16x32xf32>
    %59 = vector.extract_strided_slice %35 {offsets = [1, 0, 0], sizes = [1, 1, 32], strides = [1, 1, 1]} : vector<3x3x32xf32> to vector<1x1x32xf32>
    %60 = vector.shape_cast %59 : vector<1x1x32xf32> to vector<1x32xf32>
    %61 = vector.shape_cast %60 : vector<1x32xf32> to vector<1x1x32xf32>
    %62 = vector.broadcast %61 : vector<1x1x32xf32> to vector<8x16x32xf32>
    %63 = arith.mulf %58, %62 : vector<8x16x32xf32>
    %64 = arith.addf %57, %63 : vector<8x16x32xf32>
    %65 = vector.extract_strided_slice %34 {offsets = [1, 1, 0], sizes = [8, 16, 32], strides = [1, 1, 1]} : vector<10x18x32xf32> to vector<8x16x32xf32>
    %66 = vector.extract_strided_slice %35 {offsets = [1, 1, 0], sizes = [1, 1, 32], strides = [1, 1, 1]} : vector<3x3x32xf32> to vector<1x1x32xf32>
    %67 = vector.shape_cast %66 : vector<1x1x32xf32> to vector<1x32xf32>
    %68 = vector.shape_cast %67 : vector<1x32xf32> to vector<1x1x32xf32>
    %69 = vector.broadcast %68 : vector<1x1x32xf32> to vector<8x16x32xf32>
    %70 = arith.mulf %65, %69 : vector<8x16x32xf32>
    %71 = arith.addf %64, %70 : vector<8x16x32xf32>
    %72 = vector.extract_strided_slice %34 {offsets = [1, 2, 0], sizes = [8, 16, 32], strides = [1, 1, 1]} : vector<10x18x32xf32> to vector<8x16x32xf32>
    %73 = vector.extract_strided_slice %35 {offsets = [1, 2, 0], sizes = [1, 1, 32], strides = [1, 1, 1]} : vector<3x3x32xf32> to vector<1x1x32xf32>
    %74 = vector.shape_cast %73 : vector<1x1x32xf32> to vector<1x32xf32>
    %75 = vector.shape_cast %74 : vector<1x32xf32> to vector<1x1x32xf32>
    %76 = vector.broadcast %75 : vector<1x1x32xf32> to vector<8x16x32xf32>
    %77 = arith.mulf %72, %76 : vector<8x16x32xf32>
    %78 = arith.addf %71, %77 : vector<8x16x32xf32>
    %79 = vector.extract_strided_slice %34 {offsets = [2, 0, 0], sizes = [8, 16, 32], strides = [1, 1, 1]} : vector<10x18x32xf32> to vector<8x16x32xf32>
    %80 = vector.extract_strided_slice %35 {offsets = [2, 0, 0], sizes = [1, 1, 32], strides = [1, 1, 1]} : vector<3x3x32xf32> to vector<1x1x32xf32>
    %81 = vector.shape_cast %80 : vector<1x1x32xf32> to vector<1x32xf32>
    %82 = vector.shape_cast %81 : vector<1x32xf32> to vector<1x1x32xf32>
    %83 = vector.broadcast %82 : vector<1x1x32xf32> to vector<8x16x32xf32>
    %84 = arith.mulf %79, %83 : vector<8x16x32xf32>
    %85 = arith.addf %78, %84 : vector<8x16x32xf32>
    %86 = vector.extract_strided_slice %34 {offsets = [2, 1, 0], sizes = [8, 16, 32], strides = [1, 1, 1]} : vector<10x18x32xf32> to vector<8x16x32xf32>
    %87 = vector.extract_strided_slice %35 {offsets = [2, 1, 0], sizes = [1, 1, 32], strides = [1, 1, 1]} : vector<3x3x32xf32> to vector<1x1x32xf32>
    %88 = vector.shape_cast %87 : vector<1x1x32xf32> to vector<1x32xf32>
    %89 = vector.shape_cast %88 : vector<1x32xf32> to vector<1x1x32xf32>
    %90 = vector.broadcast %89 : vector<1x1x32xf32> to vector<8x16x32xf32>
    %91 = arith.mulf %86, %90 : vector<8x16x32xf32>
    %92 = arith.addf %85, %91 : vector<8x16x32xf32>
    %93 = vector.extract_strided_slice %34 {offsets = [2, 2, 0], sizes = [8, 16, 32], strides = [1, 1, 1]} : vector<10x18x32xf32> to vector<8x16x32xf32>
    %94 = vector.extract_strided_slice %35 {offsets = [2, 2, 0], sizes = [1, 1, 32], strides = [1, 1, 1]} : vector<3x3x32xf32> to vector<1x1x32xf32>
    %95 = vector.shape_cast %94 : vector<1x1x32xf32> to vector<1x32xf32>
    %96 = vector.shape_cast %95 : vector<1x32xf32> to vector<1x1x32xf32>
    %97 = vector.broadcast %96 : vector<1x1x32xf32> to vector<8x16x32xf32>
    %98 = arith.mulf %93, %97 : vector<8x16x32xf32>
    %99 = arith.addf %92, %98 : vector<8x16x32xf32>
    %c0_15 = arith.constant 0 : index
    %c0_16 = arith.constant 0 : index
    %100 = vector.load %arg6[%c0_15, %c0_16] : memref<1x32xf32, #tpu.memory_space<vmem>>, vector<1x32xf32>
    %101 = vector.shape_cast %100 : vector<1x32xf32> to vector<1x1x32xf32>
    %102 = vector.broadcast %101 : vector<1x1x32xf32> to vector<8x16x32xf32>
    %103 = arith.addf %99, %102 : vector<8x16x32xf32>
    %cst_17 = arith.constant 0.000000e+00 : f32
    %cst_18 = arith.constant 6.000000e+00 : f32
    %104 = vector.broadcast %cst_17 : f32 to vector<8x16x32xf32>
    %105 = arith.maximumf %104, %103 : vector<8x16x32xf32>
    %106 = vector.broadcast %cst_18 : f32 to vector<8x16x32xf32>
    %107 = arith.minimumf %106, %105 : vector<8x16x32xf32>
    %108 = vector.shape_cast %107 : vector<8x16x32xf32> to vector<128x32xf32>
    %c0_19 = arith.constant 0 : index
    %c0_20 = arith.constant 0 : index
    %109 = vector.load %arg7[%c0_19, %c0_20] : memref<8x32xf32, #tpu.memory_space<vmem>>, vector<8x32xf32>
    %cst_21 = arith.constant dense<0.000000e+00> : vector<8x128xf32>
    %110 = tpu.matmul %109, %108, %cst_21 {dimension_numbers = #tpu.dot_dimension_numbers<[1], [1], [0], [0], [0, 0, 1, 0], [], []>} : vector<8x32xf32>, vector<128x32xf32>, vector<8x128xf32> -> vector<8x128xf32>
    %c0_22 = arith.constant 0 : index
    %c0_23 = arith.constant 0 : index
    %111 = vector.load %arg8[%c0_22, %c0_23] : memref<8x1xf32, #tpu.memory_space<vmem>>, vector<8x1xf32>
    %112 = vector.broadcast %111 : vector<8x1xf32> to vector<8x128xf32>
    %113 = arith.addf %110, %112 : vector<8x128xf32>
    %c0_24 = arith.constant 0 : index
    %c0_25 = arith.constant 0 : index
    %c0_26 = arith.constant 0 : index
    %114 = vector.load %arg9[%c0_24, %c0_25, %c0_26] : memref<1x8x128xf32, #tpu.memory_space<vmem>>, vector<1x8x128xf32>
    %115 = vector.shape_cast %114 : vector<1x8x128xf32> to vector<8x128xf32>
    %116 = arith.addf %113, %115 : vector<8x128xf32>
    %c0_27 = arith.constant 0 : index
    %c0_28 = arith.constant 0 : index
    %c0_29 = arith.constant 0 : index
    %117 = vector.load %arg10[%c0_27, %c0_28, %c0_29] : memref<1x8x128xf32, #tpu.memory_space<vmem>>, vector<1x8x128xf32>
    %118 = vector.shape_cast %117 : vector<1x8x128xf32> to vector<8x128xf32>
    %119 = vector.shape_cast %116 : vector<8x128xf32> to vector<1x8x128xf32>
    tpu.vector_store %arg10[%c0_27, %c0_28, %c0_29], %119 {strides = array<i32>} : memref<1x8x128xf32, #tpu.memory_space<vmem>>, vector<1x8x128xf32>,
    return
  }
  func.func @transform_0(%arg0: i32, %arg1: i32) -> (i32, i32, i32, i32) {
    %c0_i32 = arith.constant 0 : i32
    %c0_i32_0 = arith.constant 0 : i32
    %c0_i32_1 = arith.constant 0 : i32
    %c0_i32_2 = arith.constant 0 : i32
    return %arg0, %c0_i32, %c0_i32_0, %c0_i32_1 : i32, i32, i32, i32
  }
  func.func @transform_1(%arg0: i32, %arg1: i32) -> (i32, i32) {
    %c0_i32 = arith.constant 0 : i32
    %c0_i32_0 = arith.constant 0 : i32
    %c0_i32_1 = arith.constant 0 : i32
    return %c0_i32, %c0_i32_0 : i32, i32
  }
  func.func @transform_2(%arg0: i32, %arg1: i32) -> (i32, i32) {
    %c0_i32 = arith.constant 0 : i32
    %c0_i32_0 = arith.constant 0 : i32
    %c0_i32_1 = arith.constant 0 : i32
    return %c0_i32, %c0_i32_0 : i32, i32
  }
  func.func @transform_3(%arg0: i32, %arg1: i32) -> (i32, i32, i32) {
    %c0_i32 = arith.constant 0 : i32
    %c0_i32_0 = arith.constant 0 : i32
    %c0_i32_1 = arith.constant 0 : i32
    %c0_i32_2 = arith.constant 0 : i32
    return %c0_i32, %c0_i32_0, %c0_i32_1 : i32, i32, i32
  }
  func.func @transform_4(%arg0: i32, %arg1: i32) -> (i32, i32) {
    %c0_i32 = arith.constant 0 : i32
    %c0_i32_0 = arith.constant 0 : i32
    %c0_i32_1 = arith.constant 0 : i32
    return %c0_i32, %c0_i32_0 : i32, i32
  }
  func.func @transform_5(%arg0: i32, %arg1: i32) -> (i32, i32) {
    %c0_i32 = arith.constant 0 : i32
    %c0_i32_0 = arith.constant 0 : i32
    %c0_i32_1 = arith.constant 0 : i32
    return %c0_i32, %c0_i32_0 : i32, i32
  }
  func.func @transform_6(%arg0: i32, %arg1: i32) -> (i32, i32) {
    %c0_i32 = arith.constant 0 : i32
    %c0_i32_0 = arith.constant 0 : i32
    %c0_i32_1 = arith.constant 0 : i32
    return %c0_i32, %c0_i32_0 : i32, i32
  }
  func.func @transform_7(%arg0: i32, %arg1: i32) -> (i32, i32, i32) {
    %c0_i32 = arith.constant 0 : i32
    %c0_i32_0 = arith.constant 0 : i32
    return %arg0, %c0_i32, %arg1 : i32, i32, i32
  }
  func.func @transform_8(%arg0: i32, %arg1: i32) -> (i32, i32, i32) {
    %c0_i32 = arith.constant 0 : i32
    %c0_i32_0 = arith.constant 0 : i32
    return %arg0, %c0_i32, %arg1 : i32, i32, i32
  }
}

</mosaic_0001>

<llo_original>
// kernel: tpu_custom_call.1
$region0: #{tpu_custom_call.1}
  #allocation0 [shape = 'u32[]', space=smem, size = 0x4, offset = 0x4, fixed_abs, tag = 'smem constant byte address 0x4 - core index']
  #allocation1 [shape = 'u32[72,128]{1,0:T(1,128)}', space=vmem, size = 0x9000, scoped, tag = 'internal scratch']
  %s0 = inlined_call_operand.vmem [shape: f32[2,18,18,8], index: 0, kind: input, shape index: {}]
  %s1 = inlined_call_operand.vmem [shape: f32[8,32], index: 1, kind: input, shape index: {}]
  %s2 = inlined_call_operand.vmem [shape: f32[1,32], index: 2, kind: input, shape index: {}]
  %s3 = inlined_call_operand.vmem [shape: f32[3,3,32], index: 3, kind: input, shape index: {}]
  %s4 = inlined_call_operand.vmem [shape: f32[1,32], index: 4, kind: input, shape index: {}]
  %s5 = inlined_call_operand.vmem [shape: f32[8,32], index: 5, kind: input, shape index: {}]
  %s6 = inlined_call_operand.vmem [shape: f32[8,1], index: 6, kind: input, shape index: {}]
  %s7 = inlined_call_operand.vmem [shape: f32[2,8,256], index: 7, kind: input, shape index: {}]
  %s8 = inlined_call_operand.hbm [shape: f32[2,8,256], index: 8, kind: output, shape index: {}]
  %s9 = sld [smem:[#allocation0]]
  $region65: #{tpu_custom_call.1} parent=0
    _
  %s11 = ssub.s32 1, %s9
  %s12 = scalar_select 0, %s11, %s9
  $region1: #{tpu_custom_call.1} parent=0
    #allocation2 [shape = 'u8[8192]{0}', space=vmem, size = 0x2000, scoped, tag = 'output window, operand 0']
    #allocation3 [shape = 's32[2]{0}', space=sflag, size = 0x8, scoped, tag = 'scoped memory for tpu_custom_call.1']
    %13 = vsyncpa [#allocation3], 0
    %s14 = scalar_lea.sflag [#allocation3], 1
    %15 = vsyncpa %s14, 0
    loop: start=0, step=1, limit=6
    $region2: #{tpu_custom_call.1} parent=1 // loop_pre_header
      _
    $region3: #{tpu_custom_call.1} parent=1 // loop_header
      %s17 = sphi 0, %s21
      %p18 = scmp.ge.s32.totalorder %s17, 6
      %s24 = sphi 0, %s36
      %s25 = sphi 0, %s32
      %s26 = sphi 0, %s24
      %s27 = sphi 0, %s25
      %s28 = sphi 0, %s26
      %s29 = sphi 0, %s27
      %s39 = sphi 0, %s41
      %s42 = sphi 0, %s39
      %s43 = sphi 0, %s42
      %s59 = sphi 0, %s43
      %s63 = sphi 0, %s63
      %s65 = sphi 0, %s63
      %s66 = sphi 0, %s65
      %s80 = sphi 0, %s66
      %s84 = sphi 0, %s84
      %s86 = sphi 0, %s84
      %s87 = sphi 0, %s86
      %s101 = sphi 0, %s87
      %s105 = sphi 0, %s105
      %s107 = sphi 0, %s105
      %s108 = sphi 0, %s107
      %s122 = sphi 0, %s108
      %s126 = sphi 0, %s126
      %s128 = sphi 0, %s126
      %s129 = sphi 0, %s128
      %s143 = sphi 0, %s129
      %s147 = sphi 0, %s147
      %s149 = sphi 0, %s147
      %s150 = sphi 0, %s149
      %s164 = sphi 0, %s150
      %s168 = sphi 0, %s168
      %s170 = sphi 0, %s168
      %s171 = sphi 0, %s170
      %s185 = sphi 0, %s171
      %s193 = sphi 0, %s195
      %s196 = sphi 0, %s193
      %s197 = sphi 0, %s196
      %s213 = sphi 0, %s197
      %s221 = sphi 0, %s223
      %s224 = sphi 0, %s221
      %s225 = sphi 0, %s224
      %s241 = sphi 0, %s225
    $region4: #{tpu_custom_call.1} parent=1 // loop_header_branch
      %20 = sbr.rel (%p18) target = $region8
    $region5: #{tpu_custom_call.1} parent=1 // loop_body
      %s22 = ssub.s32 %s17, 1
      %s23 = ssub.s32 %s17, 2
      %s30 = sadd.s32 1, %s25
      %p31 = scmp.ge.s32.totalorder %s30, 2
      %s32 = scalar_select %p31, 0, %s30
      %s33 = sadd.s32 1, %s24
      %s34 = scalar_select %p31, %s33, %s24
      %p35 = scmp.ge.s32.totalorder %s34, 2
      %s36 = scalar_select %p35, 0, %s34
      %s37 = ssub.s32 %s24, %s36
      %p38 = scmp.eq.s32.totalorder %s37, 0
      %s40 = sadd.s32 %s39, 1
      %s41 = scalar_select %p38, %s39, %s40
      %p44 = pneg %p38
      %p45 = scmp.eq.s32.totalorder %s17, 3
      %p46 = por %p44, %p45
      %p47 = scmp.ne.s32.totalorder %s39, %s42
      %p48 = scmp.eq.s32.totalorder %s17, 0
      %p49 = por %p47, %p48
      %p50 = scmp.ne.s32.totalorder %s39, %s42
      %p51 = scmp.eq.s32.totalorder %s22, 3
      %p52 = por %p50, %p51
      %p53 = scmp.ne.s32.totalorder %s42, %s43
      %p54 = scmp.eq.s32.totalorder %s22, 0
      %p55 = por %p53, %p54
      %p56 = scmp.ne.s32.totalorder %s42, %s43
      %p57 = scmp.eq.s32.totalorder %s23, 3
      %p58 = por %p56, %p57
      %p60 = scmp.ne.s32.totalorder %s43, %s59
      %p61 = scmp.eq.s32.totalorder %s23, 0
      %p62 = por %p60, %p61
      %s64 = sadd.s32 %s63, 1
      %p67 = scmp.eq.s32.totalorder %s17, 3
      %p68 = scmp.ne.s32.totalorder %s63, %s65
      %p69 = scmp.eq.s32.totalorder %s17, 0
      %p70 = por %p68, %p69
      %p71 = scmp.ne.s32.totalorder %s63, %s65
      %p72 = scmp.eq.s32.totalorder %s22, 3
      %p73 = por %p71, %p72
      %p74 = scmp.ne.s32.totalorder %s65, %s66
      %p75 = scmp.eq.s32.totalorder %s22, 0
      %p76 = por %p74, %p75
      %p77 = scmp.ne.s32.totalorder %s65, %s66
      %p78 = scmp.eq.s32.totalorder %s23, 3
      %p79 = por %p77, %p78
      %p81 = scmp.ne.s32.totalorder %s66, %s80
      %p82 = scmp.eq.s32.totalorder %s23, 0
      %p83 = por %p81, %p82
      %s85 = sadd.s32 %s84, 1
      %p88 = scmp.eq.s32.totalorder %s17, 3
      %p89 = scmp.ne.s32.totalorder %s84, %s86
      %p90 = scmp.eq.s32.totalorder %s17, 0
      %p91 = por %p89, %p90
      %p92 = scmp.ne.s32.totalorder %s84, %s86
      %p93 = scmp.eq.s32.totalorder %s22, 3
      %p94 = por %p92, %p93
      %p95 = scmp.ne.s32.totalorder %s86, %s87
      %p96 = scmp.eq.s32.totalorder %s22, 0
      %p97 = por %p95, %p96
      %p98 = scmp.ne.s32.totalorder %s86, %s87
      %p99 = scmp.eq.s32.totalorder %s23, 3
      %p100 = por %p98, %p99
      %p102 = scmp.ne.s32.totalorder %s87, %s101
      %p103 = scmp.eq.s32.totalorder %s23, 0
      %p104 = por %p102, %p103
      %s106 = sadd.s32 %s105, 1
      %p109 = scmp.eq.s32.totalorder %s17, 3
      %p110 = scmp.ne.s32.totalorder %s105, %s107
      %p111 = scmp.eq.s32.totalorder %s17, 0
      %p112 = por %p110, %p111
      %p113 = scmp.ne.s32.totalorder %s105, %s107
      %p114 = scmp.eq.s32.totalorder %s22, 3
      %p115 = por %p113, %p114
      %p116 = scmp.ne.s32.totalorder %s107, %s108
      %p117 = scmp.eq.s32.totalorder %s22, 0
      %p118 = por %p116, %p117
      %p119 = scmp.ne.s32.totalorder %s107, %s108
      %p120 = scmp.eq.s32.totalorder %s23, 3
      %p121 = por %p119, %p120
      %p123 = scmp.ne.s32.totalorder %s108, %s122
      %p124 = scmp.eq.s32.totalorder %s23, 0
      %p125 = por %p123, %p124
      %s127 = sadd.s32 %s126, 1
      %p130 = scmp.eq.s32.totalorder %s17, 3
      %p131 = scmp.ne.s32.totalorder %s126, %s128
      %p132 = scmp.eq.s32.totalorder %s17, 0
      %p133 = por %p131, %p132
      %p134 = scmp.ne.s32.totalorder %s126, %s128
      %p135 = scmp.eq.s32.totalorder %s22, 3
      %p136 = por %p134, %p135
      %p137 = scmp.ne.s32.totalorder %s128, %s129
      %p138 = scmp.eq.s32.totalorder %s22, 0
      %p139 = por %p137, %p138
      %p140 = scmp.ne.s32.totalorder %s128, %s129
      %p141 = scmp.eq.s32.totalorder %s23, 3
      %p142 = por %p140, %p141
      %p144 = scmp.ne.s32.totalorder %s129, %s143
      %p145 = scmp.eq.s32.totalorder %s23, 0
      %p146 = por %p144, %p145
      %s148 = sadd.s32 %s147, 1
      %p151 = scmp.eq.s32.totalorder %s17, 3
      %p152 = scmp.ne.s32.totalorder %s147, %s149
      %p153 = scmp.eq.s32.totalorder %s17, 0
      %p154 = por %p152, %p153
      %p155 = scmp.ne.s32.totalorder %s147, %s149
      %p156 = scmp.eq.s32.totalorder %s22, 3
      %p157 = por %p155, %p156
      %p158 = scmp.ne.s32.totalorder %s149, %s150
      %p159 = scmp.eq.s32.totalorder %s22, 0
      %p160 = por %p158, %p159
      %p161 = scmp.ne.s32.totalorder %s149, %s150
      %p162 = scmp.eq.s32.totalorder %s23, 3
      %p163 = por %p161, %p162
      %p165 = scmp.ne.s32.totalorder %s150, %s164
      %p166 = scmp.eq.s32.totalorder %s23, 0
      %p167 = por %p165, %p166
      %s169 = sadd.s32 %s168, 1
      %p172 = scmp.eq.s32.totalorder %s17, 3
      %p173 = scmp.ne.s32.totalorder %s168, %s170
      %p174 = scmp.eq.s32.totalorder %s17, 0
      %p175 = por %p173, %p174
      %p176 = scmp.ne.s32.totalorder %s168, %s170
      %p177 = scmp.eq.s32.totalorder %s22, 3
      %p178 = por %p176, %p177
      %p179 = scmp.ne.s32.totalorder %s170, %s171
      %p180 = scmp.eq.s32.totalorder %s22, 0
      %p181 = por %p179, %p180
      %p182 = scmp.ne.s32.totalorder %s170, %s171
      %p183 = scmp.eq.s32.totalorder %s23, 3
      %p184 = por %p182, %p183
      %p186 = scmp.ne.s32.totalorder %s171, %s185
      %p187 = scmp.eq.s32.totalorder %s23, 0
      %p188 = por %p186, %p187
      %s189 = ssub.s32 %s24, %s36
      %s190 = ssub.s32 %s25, %s32
      %s191 = sor.u32 %s189, %s190
      %p192 = scmp.eq.s32.totalorder %s191, 0
      %s194 = sadd.s32 %s193, 1
      %s195 = scalar_select %p192, %s193, %s194
      %p198 = pneg %p192
      %p199 = scmp.eq.s32.totalorder %s17, 3
      %p200 = por %p198, %p199
      %p201 = scmp.ne.s32.totalorder %s193, %s196
      %p202 = scmp.eq.s32.totalorder %s17, 0
      %p203 = por %p201, %p202
      %p204 = scmp.ne.s32.totalorder %s193, %s196
      %p205 = scmp.eq.s32.totalorder %s22, 3
      %p206 = por %p204, %p205
      %p207 = scmp.ne.s32.totalorder %s196, %s197
      %p208 = scmp.eq.s32.totalorder %s22, 0
      %p209 = por %p207, %p208
      %p210 = scmp.ne.s32.totalorder %s196, %s197
      %p211 = scmp.eq.s32.totalorder %s23, 3
      %p212 = por %p210, %p211
      %p214 = scmp.ne.s32.totalorder %s197, %s213
      %p215 = scmp.eq.s32.totalorder %s23, 0
      %p216 = por %p214, %p215
      %s217 = ssub.s32 %s24, %s36
      %s218 = ssub.s32 %s25, %s32
      %s219 = sor.u32 %s217, %s218
      %p220 = scmp.eq.s32.totalorder %s219, 0
      %s222 = sadd.s32 %s221, 1
      %s223 = scalar_select %p220, %s221, %s222
      %p226 = pneg %p220
      %p227 = scmp.eq.s32.totalorder %s17, 3
      %p228 = por %p226, %p227
      %p229 = scmp.ne.s32.totalorder %s221, %s224
      %p230 = scmp.eq.s32.totalorder %s17, 0
      %p231 = por %p229, %p230
      %p232 = scmp.ne.s32.totalorder %s221, %s224
      %p233 = scmp.eq.s32.totalorder %s22, 3
      %p234 = por %p232, %p233
      %p235 = scmp.ne.s32.totalorder %s224, %s225
      %p236 = scmp.eq.s32.totalorder %s22, 0
      %p237 = por %p235, %p236
      %p238 = scmp.ne.s32.totalorder %s224, %s225
      %p239 = scmp.eq.s32.totalorder %s23, 3
      %p240 = por %p238, %p239
      %p242 = scmp.ne.s32.totalorder %s225, %s241
      %p243 = scmp.eq.s32.totalorder %s23, 0
      %p244 = por %p242, %p243
      %p245 = scmp.le.s32.totalorder 1, %s17
      %p246 = scmp.lt.s32.totalorder %s17, 5
      %p247 = pnand %p245, %p246
      %p248 = pneg %p247
      // Predicated region
      $region9: #{tpu_custom_call.1} parent=5 // pred_check
        _
      $region10: #{tpu_custom_call.1} parent=5 // pred_check_branch
        %250 = sbr.rel (%p247) target = $region12
      $region11: #{tpu_custom_call.1} parent=5 // pred_region
        %s251 = ssub.s32 %s17, 1
        // Predicated region
        $region13: #{tpu_custom_call.1} parent=11 // pred_check
          %p252 = pneg %p76
        $region14: #{tpu_custom_call.1} parent=11 // pred_check_branch
          %254 = sbr.rel (%p252) target = $region16
        $region15: #{tpu_custom_call.1} parent=11 // pred_region
          _
        $region16: #{tpu_custom_call.1} parent=11 // pred_fallthru
          _
        // Predicated region
        $region17: #{tpu_custom_call.1} parent=11 // pred_check
          %p255 = pneg %p97
        $region18: #{tpu_custom_call.1} parent=11 // pred_check_branch
          %257 = sbr.rel (%p255) target = $region20
        $region19: #{tpu_custom_call.1} parent=11 // pred_region
          _
        $region20: #{tpu_custom_call.1} parent=11 // pred_fallthru
          _
        // Predicated region
        $region21: #{tpu_custom_call.1} parent=11 // pred_check
          %p258 = pneg %p118
        $region22: #{tpu_custom_call.1} parent=11 // pred_check_branch
          %260 = sbr.rel (%p258) target = $region24
        $region23: #{tpu_custom_call.1} parent=11 // pred_region
          _
        $region24: #{tpu_custom_call.1} parent=11 // pred_fallthru
          _
        // Predicated region
        $region25: #{tpu_custom_call.1} parent=11 // pred_check
          %p261 = pneg %p139
        $region26: #{tpu_custom_call.1} parent=11 // pred_check_branch
          %263 = sbr.rel (%p261) target = $region28
        $region27: #{tpu_custom_call.1} parent=11 // pred_region
          _
        $region28: #{tpu_custom_call.1} parent=11 // pred_fallthru
          _
        // Predicated region
        $region29: #{tpu_custom_call.1} parent=11 // pred_check
          %p264 = pneg %p160
        $region30: #{tpu_custom_call.1} parent=11 // pred_check_branch
          %266 = sbr.rel (%p264) target = $region32
        $region31: #{tpu_custom_call.1} parent=11 // pred_region
          _
        $region32: #{tpu_custom_call.1} parent=11 // pred_fallthru
          _
        // Predicated region
        $region33: #{tpu_custom_call.1} parent=11 // pred_check
          %p267 = pneg %p181
        $region34: #{tpu_custom_call.1} parent=11 // pred_check_branch
          %269 = sbr.rel (%p267) target = $region36
        $region35: #{tpu_custom_call.1} parent=11 // pred_region
          _
        $region36: #{tpu_custom_call.1} parent=11 // pred_fallthru
          _
      $region12: #{tpu_custom_call.1} parent=5 // pred_fallthru
        _
      %p270 = scmp.lt.s32.totalorder %s17, 4
      // Predicated region
      $region37: #{tpu_custom_call.1} parent=5 // pred_check
        %p271 = pneg %p270
      $region38: #{tpu_custom_call.1} parent=5 // pred_check_branch
        %273 = sbr.rel (%p271) target = $region40
      $region39: #{tpu_custom_call.1} parent=5 // pred_region
        // Predicated region
        $region41: #{tpu_custom_call.1} parent=39 // pred_check
          %p274 = pneg %p49
        $region42: #{tpu_custom_call.1} parent=39 // pred_check_branch
          %276 = sbr.rel (%p274) target = $region44
        $region43: #{tpu_custom_call.1} parent=39 // pred_region
          %p277 = scmp.lt.s32.totalorder %s24, 1
          %s278 = scalar_select %p277, %s24, 1
          %s279 = smul.addr %s278, 54
          %s280 = smul.addr %s279, 8
          %s281 = scalar_lea.vmem %s0, %s280
        $region44: #{tpu_custom_call.1} parent=39 // pred_fallthru
          _
        // Predicated region
        $region45: #{tpu_custom_call.1} parent=39 // pred_check
          %p282 = pneg %p203
        $region46: #{tpu_custom_call.1} parent=39 // pred_check_branch
          %284 = sbr.rel (%p282) target = $region48
        $region47: #{tpu_custom_call.1} parent=39 // pred_region
          %p285 = scmp.lt.s32.totalorder %s24, 1
          %s286 = scalar_select %p285, %s24, 1
          %p287 = scmp.lt.s32.totalorder %s25, 1
          %s288 = scalar_select %p287, %s25, 1
          %s289 = smul.addr %s286, 2
          %s290 = sadd.s32 %s288, %s289
          %s291 = smul.addr %s290, 8
          %s292 = scalar_lea.vmem %s7, %s291
        $region48: #{tpu_custom_call.1} parent=39 // pred_fallthru
          _
      $region40: #{tpu_custom_call.1} parent=5 // pred_fallthru
        _
      %p293 = scmp.le.s32.totalorder 1, %s17
      %p294 = scmp.lt.s32.totalorder %s17, 5
      %p295 = pnand %p293, %p294
      %p296 = pneg %p295
      // Predicated region
      $region49: #{tpu_custom_call.1} parent=5 // pred_check
        _
      $region50: #{tpu_custom_call.1} parent=5 // pred_check_branch
        %298 = sbr.rel (%p295) target = $region52
      $region51: #{tpu_custom_call.1} parent=5 // pred_region
        %s299 = ssub.s32 %s17, 1
        %p300 = scmp.lt.s32.totalorder %s26, 1
        %s301 = scalar_select %p300, %s26, 1
        %s302 = smul.addr %s301, 54
        %s303 = smul.addr %s302, 8
        %s304 = scalar_lea.vmem %s0, %s303
        %p305 = pneg %p55
        %p306 = pneg %p52
        %p307 = pneg %p76
        %p308 = pneg %p73
        %p309 = pneg %p97
        %p310 = pneg %p94
        %p311 = pneg %p118
        %p312 = pneg %p115
        %p313 = pneg %p139
        %p314 = pneg %p136
        %p315 = pneg %p160
        %p316 = pneg %p157
        %p317 = pneg %p181
        %p318 = pneg %p178
        %p319 = scmp.lt.s32.totalorder %s26, 1
        %s320 = scalar_select %p319, %s26, 1
        %p321 = scmp.lt.s32.totalorder %s27, 1
        %s322 = scalar_select %p321, %s27, 1
        %s323 = smul.addr %s320, 2
        %s324 = sadd.s32 %s322, %s323
        %s325 = smul.addr %s324, 8
        %s326 = scalar_lea.vmem %s7, %s325
        %p327 = pneg %p209
        %p328 = pneg %p206
        %p329 = pneg %p237
        %p330 = pneg %p234
        %s331 = sand.u32 %s224, 1
        %s332 = scalar_lea.sflag [#allocation3], %s331
        %s333 = sand.u32 %s224, 1
        %s334 = smul.addr %s333, 8
        %s335 = scalar_lea.vmem [#allocation2], %s334
        %p336 = scmp.lt.s32.totalorder %s26, 1
        %s337 = scalar_select %p336, %s26, 1
        %s338 = smul.addr %s337, 54
        %s339 = smul.addr %s338, 8
        %s340 = scalar_lea.vmem %s0, %s339
        %p341 = scmp.lt.s32.totalorder %s26, 1
        %s342 = scalar_select %p341, %s26, 1
        %p343 = scmp.lt.s32.totalorder %s27, 1
        %s344 = scalar_select %p343, %s27, 1
        %s345 = smul.addr %s342, 2
        %s346 = sadd.s32 %s344, %s345
        %s347 = smul.addr %s346, 8
        %s348 = scalar_lea.vmem %s7, %s347
        %s349 = smul.u32 %s27, 8
        %s350 = smul.u32 %s349, 24
        %s351 = scalar_lea.vmem %s340, %s350
        %v352 = vld [vmem:[%s351] sm:$0xff]
        %v353 = vld [vmem:[%s351 + $0x8] sm:$0xff]
        %v354 = vld [vmem:[%s351 + $0x10] sm:$0x3]
        %v355 = vld [vmem:[%s351 + $0x18] sm:$0xff]
        %v356 = vld [vmem:[%s351 + $0x20] sm:$0xff]
        %v357 = vld [vmem:[%s351 + $0x28] sm:$0x3]
        %v358 = vld [vmem:[%s351 + $0x30] sm:$0xff]
        %v359 = vld [vmem:[%s351 + $0x38] sm:$0xff]
        %v360 = vld [vmem:[%s351 + $0x40] sm:$0x3]
        %v361 = vld [vmem:[%s351 + $0x48] sm:$0xff]
        %v362 = vld [vmem:[%s351 + $0x50] sm:$0xff]
        %v363 = vld [vmem:[%s351 + $0x58] sm:$0x3]
        %v364 = vld [vmem:[%s351 + $0x60] sm:$0xff]
        %v365 = vld [vmem:[%s351 + $0x68] sm:$0xff]
        %v366 = vld [vmem:[%s351 + $0x70] sm:$0x3]
        %v367 = vld [vmem:[%s351 + $0x78] sm:$0xff]
        %v368 = vld [vmem:[%s351 + $0x80] sm:$0xff]
        %v369 = vld [vmem:[%s351 + $0x88] sm:$0x3]
        %v370 = vld [vmem:[%s351 + $0x90] sm:$0xff]
        %v371 = vld [vmem:[%s351 + $0x98] sm:$0xff]
        %v372 = vld [vmem:[%s351 + $0xa0] sm:$0x3]
        %v373 = vld [vmem:[%s351 + $0xa8] sm:$0xff]
        %v374 = vld [vmem:[%s351 + $0xb0] sm:$0xff]
        %v375 = vld [vmem:[%s351 + $0xb8] sm:$0x3]
        %v376 = vld [vmem:[%s351 + $0xc0] sm:$0xff]
        %v377 = vld [vmem:[%s351 + $0xc8] sm:$0xff]
        %v378 = vld [vmem:[%s351 + $0xd0] sm:$0x3]
        %v379 = vld [vmem:[%s351 + $0xd8] sm:$0xff]
        %v380 = vld [vmem:[%s351 + $0xe0] sm:$0xff]
        %v381 = vld [vmem:[%s351 + $0xe8] sm:$0x3]
        %v412 = vrot.slane %v352, 2
        %v413 = vrot.slane %v352, 4
        %v414 = vrot.slane %v352, 6
        %v415 = vrot.slane %v353, 2
        %v416 = vrot.slane %v353, 4
        %v417 = vrot.slane %v353, 6
        %v418 = vrot.slane %v355, 2
        %v419 = vrot.slane %v355, 4
        %v420 = vrot.slane %v355, 6
        %v421 = vrot.slane %v356, 2
        %v422 = vrot.slane %v356, 4
        %v423 = vrot.slane %v356, 6
        %v424 = vrot.slane %v358, 2
        %v425 = vrot.slane %v358, 4
        %v426 = vrot.slane %v358, 6
        %v427 = vrot.slane %v359, 2
        %v428 = vrot.slane %v359, 4
        %v429 = vrot.slane %v359, 6
        %v430 = vrot.slane %v361, 2
        %v431 = vrot.slane %v361, 4
        %v432 = vrot.slane %v361, 6
        %v433 = vrot.slane %v362, 2
        %v434 = vrot.slane %v362, 4
        %v435 = vrot.slane %v362, 6
        %v436 = vrot.slane %v364, 2
        %v437 = vrot.slane %v364, 4
        %v438 = vrot.slane %v364, 6
        %v439 = vrot.slane %v365, 2
        %v440 = vrot.slane %v365, 4
        %v441 = vrot.slane %v365, 6
        %v442 = vrot.slane %v367, 2
        %v443 = vrot.slane %v367, 4
        %v444 = vrot.slane %v367, 6
        %v445 = vrot.slane %v368, 2
        %v446 = vrot.slane %v368, 4
        %v447 = vrot.slane %v368, 6
        %v448 = vrot.slane %v370, 2
        %v449 = vrot.slane %v370, 4
        %v450 = vrot.slane %v370, 6
        %v451 = vrot.slane %v371, 2
        %v452 = vrot.slane %v371, 4
        %v453 = vrot.slane %v371, 6
        %v454 = vrot.slane %v373, 2
        %v455 = vrot.slane %v373, 4
        %v456 = vrot.slane %v373, 6
        %v457 = vrot.slane %v374, 2
        %v458 = vrot.slane %v374, 4
        %v459 = vrot.slane %v374, 6
        %v460 = vrot.slane %v376, 2
        %v461 = vrot.slane %v376, 4
        %v462 = vrot.slane %v376, 6
        %v463 = vrot.slane %v377, 2
        %v464 = vrot.slane %v377, 4
        %v465 = vrot.slane %v377, 6
        %v466 = vrot.slane %v379, 2
        %v467 = vrot.slane %v379, 4
        %v468 = vrot.slane %v379, 6
        %v469 = vrot.slane %v380, 2
        %v470 = vrot.slane %v380, 4
        %v471 = vrot.slane %v380, 6
        %v472 = vld [vmem:[%s1] sm:$0xff]
        %v473 = vld [vmem:[%s2] sm:$0x1]
        %v475 = vperm.slane %v473, 0
        %477 = vst [vmem:[#allocation1] ss:$4 sm:$0xff] %v352
        %s478 = scalar_lea.vmem [#allocation1], 1
        %479 = vst [vmem:[%s478] ss:$4 sm:$0xff] %v412
        %s480 = scalar_lea.vmem [#allocation1], 2
        %481 = vst [vmem:[%s480] ss:$4 sm:$0xff] %v413
        %s482 = scalar_lea.vmem [#allocation1], 3
        %483 = vst [vmem:[%s482] ss:$4 sm:$0xff] %v414
        %s484 = scalar_lea.vmem [#allocation1], 32
        %485 = vst [vmem:[%s484] ss:$4 sm:$0xff] %v353
        %s486 = scalar_lea.vmem [#allocation1], 33
        %487 = vst [vmem:[%s486] ss:$4 sm:$0xff] %v415
        %s488 = scalar_lea.vmem [#allocation1], 34
        %489 = vst [vmem:[%s488] ss:$4 sm:$0xff] %v416
        %s490 = scalar_lea.vmem [#allocation1], 35
        %491 = vst [vmem:[%s490] ss:$4 sm:$0xff] %v417
        %v492 = vld.sshfl [vmem:[#allocation1] sm:$0xff pattern:$0x73625140]
        %v493 = vld.sshfl [vmem:[#allocation1 + $0x20] sm:$0xff pattern:$0x73625140]
        %494 = vst [vmem:[#allocation1] ss:$4 sm:$0xff] %v354
        %495 = vst [vmem:[%s478] ss:$4 sm:$0xff] %v355
        %496 = vst [vmem:[%s480] ss:$4 sm:$0xff] %v418
        %497 = vst [vmem:[%s482] ss:$4 sm:$0xff] %v419
        %498 = vst [vmem:[%s484] ss:$4 sm:$0xff] %v420
        %499 = vst [vmem:[%s486] ss:$4 sm:$0xff] %v356
        %500 = vst [vmem:[%s488] ss:$4 sm:$0xff] %v421
        %501 = vst [vmem:[%s490] ss:$4 sm:$0xff] %v422
        %v502 = vld.sshfl [vmem:[#allocation1] sm:$0xff pattern:$0x73625140]
        %v503 = vld.sshfl [vmem:[#allocation1 + $0x20] sm:$0xff pattern:$0x73625140]
        %504 = vst [vmem:[#allocation1] ss:$4 sm:$0xff] %v423
        %505 = vst [vmem:[%s478] ss:$4 sm:$0xff] %v357
        %506 = vst [vmem:[%s480] ss:$4 sm:$0xff] %v358
        %507 = vst [vmem:[%s482] ss:$4 sm:$0xff] %v424
        %508 = vst [vmem:[%s484] ss:$4 sm:$0xff] %v425
        %509 = vst [vmem:[%s486] ss:$4 sm:$0xff] %v426
        %510 = vst [vmem:[%s488] ss:$4 sm:$0xff] %v359
        %511 = vst [vmem:[%s490] ss:$4 sm:$0xff] %v427
        %v512 = vld.sshfl [vmem:[#allocation1] sm:$0xff pattern:$0x73625140]
        %v513 = vld.sshfl [vmem:[#allocation1 + $0x20] sm:$0xff pattern:$0x73625140]
        %514 = vst [vmem:[#allocation1] ss:$4 sm:$0xff] %v428
        %515 = vst [vmem:[%s478] ss:$4 sm:$0xff] %v429
        %516 = vst [vmem:[%s480] ss:$4 sm:$0xff] %v360
        %517 = vst [vmem:[%s482] ss:$4 sm:$0xff] %v361
        %518 = vst [vmem:[%s484] ss:$4 sm:$0xff] %v430
        %519 = vst [vmem:[%s486] ss:$4 sm:$0xff] %v431
        %520 = vst [vmem:[%s488] ss:$4 sm:$0xff] %v432
        %521 = vst [vmem:[%s490] ss:$4 sm:$0xff] %v362
        %v522 = vld.sshfl [vmem:[#allocation1] sm:$0xff pattern:$0x73625140]
        %v523 = vld.sshfl [vmem:[#allocation1 + $0x20] sm:$0xff pattern:$0x73625140]
        %524 = vst [vmem:[#allocation1] ss:$4 sm:$0xff] %v433
        %525 = vst [vmem:[%s478] ss:$4 sm:$0xff] %v434
        %526 = vst [vmem:[%s480] ss:$4 sm:$0xff] %v435
        %527 = vst [vmem:[%s482] ss:$4 sm:$0xff] %v363
        %528 = vst [vmem:[%s484] ss:$4 sm:$0xff] %v364
        %529 = vst [vmem:[%s486] ss:$4 sm:$0xff] %v436
        %530 = vst [vmem:[%s488] ss:$4 sm:$0xff] %v437
        %531 = vst [vmem:[%s490] ss:$4 sm:$0xff] %v438
        %v532 = vld.sshfl [vmem:[#allocation1] sm:$0xff pattern:$0x73625140]
        %v533 = vld.sshfl [vmem:[#allocation1 + $0x20] sm:$0xff pattern:$0x73625140]
        %534 = vst [vmem:[#allocation1] ss:$4 sm:$0xff] %v365
        %535 = vst [vmem:[%s478] ss:$4 sm:$0xff] %v439
        %536 = vst [vmem:[%s480] ss:$4 sm:$0xff] %v440
        %537 = vst [vmem:[%s482] ss:$4 sm:$0xff] %v441
        %538 = vst [vmem:[%s484] ss:$4 sm:$0xff] %v366
        %539 = vst [vmem:[%s486] ss:$4 sm:$0xff] %v367
        %540 = vst [vmem:[%s488] ss:$4 sm:$0xff] %v442
        %541 = vst [vmem:[%s490] ss:$4 sm:$0xff] %v443
        %v542 = vld.sshfl [vmem:[#allocation1] sm:$0xff pattern:$0x73625140]
        %v543 = vld.sshfl [vmem:[#allocation1 + $0x20] sm:$0xff pattern:$0x73625140]
        %544 = vst [vmem:[#allocation1] ss:$4 sm:$0xff] %v444
        %545 = vst [vmem:[%s478] ss:$4 sm:$0xff] %v368
        %546 = vst [vmem:[%s480] ss:$4 sm:$0xff] %v445
        %547 = vst [vmem:[%s482] ss:$4 sm:$0xff] %v446
        %548 = vst [vmem:[%s484] ss:$4 sm:$0xff] %v447
        %549 = vst [vmem:[%s486] ss:$4 sm:$0xff] %v369
        %550 = vst [vmem:[%s488] ss:$4 sm:$0xff] %v370
        %551 = vst [vmem:[%s490] ss:$4 sm:$0xff] %v448
        %v552 = vld.sshfl [vmem:[#allocation1] sm:$0xff pattern:$0x73625140]
        %v553 = vld.sshfl [vmem:[#allocation1 + $0x20] sm:$0xff pattern:$0x73625140]
        %554 = vst [vmem:[#allocation1] ss:$4 sm:$0xff] %v449
        %555 = vst [vmem:[%s478] ss:$4 sm:$0xff] %v450
        %556 = vst [vmem:[%s480] ss:$4 sm:$0xff] %v371
        %557 = vst [vmem:[%s482] ss:$4 sm:$0xff] %v451
        %558 = vst [vmem:[%s484] ss:$4 sm:$0xff] %v452
        %559 = vst [vmem:[%s486] ss:$4 sm:$0xff] %v453
        %560 = vst [vmem:[%s488] ss:$4 sm:$0xff] %v372
        %561 = vst [vmem:[%s490] ss:$4 sm:$0xff] %v373
        %v562 = vld.sshfl [vmem:[#allocation1] sm:$0xff pattern:$0x73625140]
        %v563 = vld.sshfl [vmem:[#allocation1 + $0x20] sm:$0xff pattern:$0x73625140]
        %564 = vst [vmem:[#allocation1] ss:$4 sm:$0xff] %v454
        %565 = vst [vmem:[%s478] ss:$4 sm:$0xff] %v455
        %566 = vst [vmem:[%s480] ss:$4 sm:$0xff] %v456
        %567 = vst [vmem:[%s482] ss:$4 sm:$0xff] %v374
        %568 = vst [vmem:[%s484] ss:$4 sm:$0xff] %v457
        %569 = vst [vmem:[%s486] ss:$4 sm:$0xff] %v458
        %570 = vst [vmem:[%s488] ss:$4 sm:$0xff] %v459
        %571 = vst [vmem:[%s490] ss:$4 sm:$0xff] %v375
        %v572 = vld.sshfl [vmem:[#allocation1] sm:$0xff pattern:$0x73625140]
        %v573 = vld.sshfl [vmem:[#allocation1 + $0x20] sm:$0xff pattern:$0x73625140]
        %574 = vst [vmem:[#allocation1] ss:$4 sm:$0xff] %v376
        %575 = vst [vmem:[%s478] ss:$4 sm:$0xff] %v460
        %576 = vst [vmem:[%s480] ss:$4 sm:$0xff] %v461
        %577 = vst [vmem:[%s482] ss:$4 sm:$0xff] %v462
        %578 = vst [vmem:[%s484] ss:$4 sm:$0xff] %v377
        %579 = vst [vmem:[%s486] ss:$4 sm:$0xff] %v463
        %580 = vst [vmem:[%s488] ss:$4 sm:$0xff] %v464
        %581 = vst [vmem:[%s490] ss:$4 sm:$0xff] %v465
        %v582 = vld.sshfl [vmem:[#allocation1] sm:$0xff pattern:$0x73625140]
        %v583 = vld.sshfl [vmem:[#allocation1 + $0x20] sm:$0xff pattern:$0x73625140]
        %584 = vst [vmem:[#allocation1] ss:$4 sm:$0xff] %v378
        %585 = vst [vmem:[%s478] ss:$4 sm:$0xff] %v379
        %586 = vst [vmem:[%s480] ss:$4 sm:$0xff] %v466
        %587 = vst [vmem:[%s482] ss:$4 sm:$0xff] %v467
        %588 = vst [vmem:[%s484] ss:$4 sm:$0xff] %v468
        %589 = vst [vmem:[%s486] ss:$4 sm:$0xff] %v380
        %590 = vst [vmem:[%s488] ss:$4 sm:$0xff] %v469
        %591 = vst [vmem:[%s490] ss:$4 sm:$0xff] %v470
        %v592 = vld.sshfl [vmem:[#allocation1] sm:$0xff pattern:$0x73625140]
        %v593 = vld.sshfl [vmem:[#allocation1 + $0x20] sm:$0xff pattern:$0x73625140]
        %594 = vst [vmem:[#allocation1] ss:$4 sm:$0xff] %v471
        %595 = vst [vmem:[%s478] ss:$4 sm:$0xff] %v381
        %v596 = vld.sshfl [vmem:[#allocation1] sm:$0xff pattern:$0x73625140]
        %vm597 = vcmask 64512
        %v598 = vsel %vm597, %v492, 0
        %v600 = vsel %vm597, %v493, 0
        %v602 = vsel %vm597, %v502, 0
        %v604 = vsel %vm597, %v503, 0
        %v606 = vsel %vm597, %v512, 0
        %v608 = vsel %vm597, %v513, 0
        %v610 = vsel %vm597, %v522, 0
        %v612 = vsel %vm597, %v523, 0
        %v614 = vsel %vm597, %v532, 0
        %v616 = vsel %vm597, %v533, 0
        %v618 = vsel %vm597, %v542, 0
        %v620 = vsel %vm597, %v543, 0
        %v622 = vsel %vm597, %v552, 0
        %v624 = vsel %vm597, %v553, 0
        %v626 = vsel %vm597, %v562, 0
        %v628 = vsel %vm597, %v563, 0
        %v630 = vsel %vm597, %v572, 0
        %v632 = vsel %vm597, %v573, 0
        %v634 = vsel %vm597, %v582, 0
        %v636 = vsel %vm597, %v583, 0
        %v638 = vsel %vm597, %v592, 0
        %v640 = vsel %vm597, %v593, 0
        %v642 = vsel %vm597, %v596, 0
        %644 = vmatpush.msra.mxu0 0.0
        %645 = vmatpush.msra.mxu0 0.0
        %646 = vmatpush.msra.mxu0 0.0
        %647 = vmatpush.msra.mxu0 0.0
        %648 = vmatpush.msra.mxu0 0.0
        %649 = vmatpush.msra.mxu0 0.0
        %650 = vmatpush.msra.mxu0 0.0
        %651 = vmatpush.msra.mxu0 0.0
        %652 = vmatpush.msra.mxu0 0.0
        %653 = vmatpush.msra.mxu0 0.0
        %654 = vmatpush.msra.mxu0 0.0
        %655 = vmatpush.msra.mxu0 0.0
        %656 = vmatpush.msra.mxu0 0.0
        %657 = vmatpush.msra.mxu0 0.0
        %658 = vmatpush.msra.mxu0 0.0
        %659 = vmatpush.msra.mxu0 %v472
        %660 = vmatmul.f32.gmra.mxu0 %v598
        %v661 = vpop.f32.mrf.mxu0
        %v662 = vadd.f32 %v475, %v661
        %663 = vmatmul.f32.gmra.mxu0 %v600
        %v664 = vpop.f32.mrf.mxu0
        %v665 = vadd.f32 %v475, %v664
        %666 = vmatmul.f32.gmra.mxu0 %v602
        %v667 = vpop.f32.mrf.mxu0
        %v668 = vadd.f32 %v475, %v667
        %669 = vmatmul.f32.gmra.mxu0 %v604
        %v670 = vpop.f32.mrf.mxu0
        %v671 = vadd.f32 %v475, %v670
        %672 = vmatmul.f32.gmra.mxu0 %v606
        %v673 = vpop.f32.mrf.mxu0
        %v674 = vadd.f32 %v475, %v673
        %675 = vmatmul.f32.gmra.mxu0 %v608
        %v676 = vpop.f32.mrf.mxu0
        %v677 = vadd.f32 %v475, %v676
        %678 = vmatmul.f32.gmra.mxu0 %v610
        %v679 = vpop.f32.mrf.mxu0
        %v680 = vadd.f32 %v475, %v679
        %681 = vmatmul.f32.gmra.mxu0 %v612
        %v682 = vpop.f32.mrf.mxu0
        %v683 = vadd.f32 %v475, %v682
        %684 = vmatmul.f32.gmra.mxu0 %v614
        %v685 = vpop.f32.mrf.mxu0
        %v686 = vadd.f32 %v475, %v685
        %687 = vmatmul.f32.gmra.mxu0 %v616
        %v688 = vpop.f32.mrf.mxu0
        %v689 = vadd.f32 %v475, %v688
        %690 = vmatmul.f32.gmra.mxu0 %v618
        %v691 = vpop.f32.mrf.mxu0
        %v692 = vadd.f32 %v475, %v691
        %693 = vmatmul.f32.gmra.mxu0 %v620
        %v694 = vpop.f32.mrf.mxu0
        %v695 = vadd.f32 %v475, %v694
        %696 = vmatmul.f32.gmra.mxu0 %v622
        %v697 = vpop.f32.mrf.mxu0
        %v698 = vadd.f32 %v475, %v697
        %699 = vmatmul.f32.gmra.mxu0 %v624
        %v700 = vpop.f32.mrf.mxu0
        %v701 = vadd.f32 %v475, %v700
        %702 = vmatmul.f32.gmra.mxu0 %v626
        %v703 = vpop.f32.mrf.mxu0
        %v704 = vadd.f32 %v475, %v703
        %705 = vmatmul.f32.gmra.mxu0 %v628
        %v706 = vpop.f32.mrf.mxu0
        %v707 = vadd.f32 %v475, %v706
        %708 = vmatmul.f32.gmra.mxu0 %v630
        %v709 = vpop.f32.mrf.mxu0
        %v710 = vadd.f32 %v475, %v709
        %711 = vmatmul.f32.gmra.mxu0 %v632
        %v712 = vpop.f32.mrf.mxu0
        %v713 = vadd.f32 %v475, %v712
        %714 = vmatmul.f32.gmra.mxu0 %v634
        %v715 = vpop.f32.mrf.mxu0
        %v716 = vadd.f32 %v475, %v715
        %717 = vmatmul.f32.gmra.mxu0 %v636
        %v718 = vpop.f32.mrf.mxu0
        %v719 = vadd.f32 %v475, %v718
        %720 = vmatmul.f32.gmra.mxu0 %v638
        %v721 = vpop.f32.mrf.mxu0
        %v722 = vadd.f32 %v475, %v721
        %723 = vmatmul.f32.gmra.mxu0 %v640
        %v724 = vpop.f32.mrf.mxu0
        %v725 = vadd.f32 %v475, %v724
        %726 = vmatmul.f32.gmra.mxu0 %v642
        %v727 = vpop.f32.mrf.mxu0
        %v728 = vadd.f32 %v475, %v727
        %729 = vdwg.mxu0
        %v730 = vmax.f32 %v662, 0.0
        %v731 = vmax.f32 %v665, 0.0
        %v732 = vmax.f32 %v668, 0.0
        %v733 = vmax.f32 %v671, 0.0
        %v734 = vmax.f32 %v674, 0.0
        %v735 = vmax.f32 %v677, 0.0
        %v736 = vmax.f32 %v680, 0.0
        %v737 = vmax.f32 %v683, 0.0
        %v738 = vmax.f32 %v686, 0.0
        %v739 = vmax.f32 %v689, 0.0
        %v740 = vmax.f32 %v692, 0.0
        %v741 = vmax.f32 %v695, 0.0
        %v742 = vmax.f32 %v698, 0.0
        %v743 = vmax.f32 %v701, 0.0
        %v744 = vmax.f32 %v704, 0.0
        %v745 = vmax.f32 %v707, 0.0
        %v746 = vmax.f32 %v710, 0.0
        %v747 = vmax.f32 %v713, 0.0
        %v748 = vmax.f32 %v716, 0.0
        %v749 = vmax.f32 %v719, 0.0
        %v750 = vmax.f32 %v722, 0.0
        %v751 = vmax.f32 %v725, 0.0
        %v752 = vmax.f32 %v728, 0.0
        %v753 = vmin.f32 %v730, 6.0
        %v754 = vmin.f32 %v731, 6.0
        %v755 = vmin.f32 %v732, 6.0
        %v756 = vmin.f32 %v733, 6.0
        %v757 = vmin.f32 %v734, 6.0
        %v758 = vmin.f32 %v735, 6.0
        %v759 = vmin.f32 %v736, 6.0
        %v760 = vmin.f32 %v737, 6.0
        %v761 = vmin.f32 %v738, 6.0
        %v762 = vmin.f32 %v739, 6.0
        %v763 = vmin.f32 %v740, 6.0
        %v764 = vmin.f32 %v741, 6.0
        %v765 = vmin.f32 %v742, 6.0
        %v766 = vmin.f32 %v743, 6.0
        %v767 = vmin.f32 %v744, 6.0
        %v768 = vmin.f32 %v745, 6.0
        %v769 = vmin.f32 %v746, 6.0
        %v770 = vmin.f32 %v747, 6.0
        %v771 = vmin.f32 %v748, 6.0
        %v772 = vmin.f32 %v749, 6.0
        %v773 = vmin.f32 %v750, 6.0
        %v774 = vmin.f32 %v751, 6.0
        %v775 = vmin.f32 %v752, 6.0
        %v799 = vrot.slane %v753, 2
        %v800 = vrot.slane %v753, 4
        %v801 = vrot.slane %v753, 6
        %v802 = vrot.slane %v754, 2
        %v803 = vrot.slane %v754, 4
        %v804 = vrot.slane %v754, 6
        %v805 = vrot.slane %v755, 2
        %v806 = vrot.slane %v755, 4
        %v807 = vrot.slane %v755, 6
        %v808 = vrot.slane %v756, 2
        %v809 = vrot.slane %v756, 4
        %v810 = vrot.slane %v756, 6
        %v811 = vrot.slane %v757, 2
        %v812 = vrot.slane %v757, 4
        %v813 = vrot.slane %v757, 6
        %v814 = vrot.slane %v758, 2
        %v815 = vrot.slane %v758, 4
        %v816 = vrot.slane %v758, 6
        %v817 = vrot.slane %v759, 2
        %v818 = vrot.slane %v759, 4
        %v819 = vrot.slane %v759, 6
        %v820 = vrot.slane %v760, 2
        %v821 = vrot.slane %v760, 4
        %v822 = vrot.slane %v760, 6
        %v823 = vrot.slane %v761, 2
        %v824 = vrot.slane %v761, 4
        %v825 = vrot.slane %v761, 6
        %v826 = vrot.slane %v762, 2
        %v827 = vrot.slane %v762, 4
        %v828 = vrot.slane %v762, 6
        %v829 = vrot.slane %v763, 2
        %v830 = vrot.slane %v763, 4
        %v831 = vrot.slane %v763, 6
        %v832 = vrot.slane %v764, 2
        %v833 = vrot.slane %v764, 4
        %v834 = vrot.slane %v764, 6
        %v835 = vrot.slane %v765, 2
        %v836 = vrot.slane %v765, 4
        %v837 = vrot.slane %v765, 6
        %v838 = vrot.slane %v766, 2
        %v839 = vrot.slane %v766, 4
        %v840 = vrot.slane %v766, 6
        %v841 = vrot.slane %v767, 2
        %v842 = vrot.slane %v767, 4
        %v843 = vrot.slane %v767, 6
        %v844 = vrot.slane %v768, 2
        %v845 = vrot.slane %v768, 4
        %v846 = vrot.slane %v768, 6
        %v847 = vrot.slane %v769, 2
        %v848 = vrot.slane %v769, 4
        %v849 = vrot.slane %v769, 6
        %v850 = vrot.slane %v770, 2
        %v851 = vrot.slane %v770, 4
        %v852 = vrot.slane %v770, 6
        %v853 = vrot.slane %v771, 2
        %v854 = vrot.slane %v771, 4
        %v855 = vrot.slane %v771, 6
        %v856 = vrot.slane %v772, 2
        %v857 = vrot.slane %v772, 4
        %v858 = vrot.slane %v772, 6
        %v859 = vrot.slane %v773, 2
        %v860 = vrot.slane %v773, 4
        %v861 = vrot.slane %v773, 6
        %v862 = vrot.slane %v774, 2
        %v863 = vrot.slane %v774, 4
        %v864 = vrot.slane %v774, 6
        %v865 = vrot.slane %v775, 2
        %v866 = vstv %s349
        %v867 = vadd.s32 %v866, 1
        %v868 = vadd.s32 %v866, 2
        %v869 = vadd.s32 %v866, 3
        %v870 = vadd.s32 %v866, 4
        %v871 = vadd.s32 %v866, 5
        %v872 = vadd.s32 %v866, 6
        %v873 = vadd.s32 %v866, 7
        %v874 = vadd.s32 %v866, 8
        %v875 = vadd.s32 %v866, 9
        %v876 = vlaneseq
        %v877 = vshrl.u32 %v876, 7
        %v878 = vadd.s32 %v877, 8
        %v879 = vadd.s32 %v877, 16
        %vm880 = vcmp.eq.s32.totalorder %v866, 0
        %vm881 = vcmp.eq.s32.totalorder %v867, 0
        %vm882 = vcmp.eq.s32.totalorder %v868, 0
        %vm883 = vcmp.eq.s32.totalorder %v869, 0
        %vm884 = vcmp.eq.s32.totalorder %v870, 0
        %vm885 = vcmp.eq.s32.totalorder %v871, 0
        %vm886 = vcmp.eq.s32.totalorder %v872, 0
        %vm887 = vcmp.eq.s32.totalorder %v873, 0
        %vm888 = vcmp.eq.s32.totalorder %v874, 0
        %vm889 = vcmp.eq.s32.totalorder %v875, 0
        %vm890 = vcmp.eq.s32.totalorder %v866, 17
        %vm891 = vcmp.eq.s32.totalorder %v867, 17
        %vm892 = vcmp.eq.s32.totalorder %v868, 17
        %vm893 = vcmp.eq.s32.totalorder %v869, 17
        %vm894 = vcmp.eq.s32.totalorder %v870, 17
        %vm895 = vcmp.eq.s32.totalorder %v871, 17
        %vm896 = vcmp.eq.s32.totalorder %v872, 17
        %vm897 = vcmp.eq.s32.totalorder %v873, 17
        %vm898 = vcmp.eq.s32.totalorder %v874, 17
        %vm899 = vcmp.eq.s32.totalorder %v875, 17
        %vm900 = vmor %vm880, %vm890
        %vm901 = vmor %vm881, %vm891
        %vm902 = vmor %vm882, %vm892
        %vm903 = vmor %vm883, %vm893
        %vm904 = vmor %vm884, %vm894
        %vm905 = vmor %vm885, %vm895
        %vm906 = vmor %vm886, %vm896
        %vm907 = vmor %vm887, %vm897
        %vm908 = vmor %vm888, %vm898
        %vm909 = vmor %vm889, %vm899
        %vm910 = vcmp.eq.s32.totalorder %v877, 0
        %vm911 = vcmp.eq.s32.totalorder %v878, 0
        %vm912 = vcmp.eq.s32.totalorder %v879, 0
        %vm913 = vmor %vm900, %vm910
        %vm914 = vmor %vm900, %vm911
        %vm915 = vmor %vm900, %vm912
        %vm916 = vmor %vm901, %vm910
        %vm917 = vmor %vm901, %vm911
        %vm918 = vmor %vm901, %vm912
        %vm919 = vmor %vm902, %vm910
        %vm920 = vmor %vm902, %vm911
        %vm921 = vmor %vm902, %vm912
        %vm922 = vmor %vm903, %vm910
        %vm923 = vmor %vm903, %vm911
        %vm924 = vmor %vm903, %vm912
        %vm925 = vmor %vm904, %vm910
        %vm926 = vmor %vm904, %vm911
        %vm927 = vmor %vm904, %vm912
        %vm928 = vmor %vm905, %vm910
        %vm929 = vmor %vm905, %vm911
        %vm930 = vmor %vm905, %vm912
        %vm931 = vmor %vm906, %vm910
        %vm932 = vmor %vm906, %vm911
        %vm933 = vmor %vm906, %vm912
        %vm934 = vmor %vm907, %vm910
        %vm935 = vmor %vm907, %vm911
        %vm936 = vmor %vm907, %vm912
        %vm937 = vmor %vm908, %vm910
        %vm938 = vmor %vm908, %vm911
        %vm939 = vmor %vm908, %vm912
        %vm940 = vmor %vm909, %vm910
        %vm941 = vmor %vm909, %vm911
        %vm942 = vmor %vm909, %vm912
        %vm943 = vcmp.eq.s32.totalorder %v877, 17
        %vm944 = vcmp.eq.s32.totalorder %v878, 17
        %vm945 = vcmp.eq.s32.totalorder %v879, 17
        %vm946 = vmor %vm913, %vm943
        %vm947 = vmor %vm914, %vm944
        %vm948 = vmor %vm915, %vm945
        %vm949 = vmor %vm916, %vm943
        %vm950 = vmor %vm917, %vm944
        %vm951 = vmor %vm918, %vm945
        %vm952 = vmor %vm919, %vm943
        %vm953 = vmor %vm920, %vm944
        %vm954 = vmor %vm921, %vm945
        %vm955 = vmor %vm922, %vm943
        %vm956 = vmor %vm923, %vm944
        %vm957 = vmor %vm924, %vm945
        %vm958 = vmor %vm925, %vm943
        %vm959 = vmor %vm926, %vm944
        %vm960 = vmor %vm927, %vm945
        %vm961 = vmor %vm928, %vm943
        %vm962 = vmor %vm929, %vm944
        %vm963 = vmor %vm930, %vm945
        %vm964 = vmor %vm931, %vm943
        %vm965 = vmor %vm932, %vm944
        %vm966 = vmor %vm933, %vm945
        %vm967 = vmor %vm934, %vm943
        %vm968 = vmor %vm935, %vm944
        %vm969 = vmor %vm936, %vm945
        %vm970 = vmor %vm937, %vm943
        %vm971 = vmor %vm938, %vm944
        %vm972 = vmor %vm939, %vm945
        %vm973 = vmor %vm940, %vm943
        %vm974 = vmor %vm941, %vm944
        %vm975 = vmor %vm942, %vm945
        %v976 = vsel %vm946, 1, 0
        %v977 = vsel %vm947, 1, 0
        %v978 = vsel %vm948, 1, 0
        %v979 = vsel %vm949, 1, 0
        %v980 = vsel %vm950, 1, 0
        %v981 = vsel %vm951, 1, 0
        %v982 = vsel %vm952, 1, 0
        %v983 = vsel %vm953, 1, 0
        %v984 = vsel %vm954, 1, 0
        %v985 = vsel %vm955, 1, 0
        %v986 = vsel %vm956, 1, 0
        %v987 = vsel %vm957, 1, 0
        %v988 = vsel %vm958, 1, 0
        %v989 = vsel %vm959, 1, 0
        %v990 = vsel %vm960, 1, 0
        %v991 = vsel %vm961, 1, 0
        %v992 = vsel %vm962, 1, 0
        %v993 = vsel %vm963, 1, 0
        %v994 = vsel %vm964, 1, 0
        %v995 = vsel %vm965, 1, 0
        %v996 = vsel %vm966, 1, 0
        %v997 = vsel %vm967, 1, 0
        %v998 = vsel %vm968, 1, 0
        %v999 = vsel %vm969, 1, 0
        %v1000 = vsel %vm970, 1, 0
        %v1001 = vsel %vm971, 1, 0
        %v1002 = vsel %vm972, 1, 0
        %v1003 = vsel %vm973, 1, 0
        %v1004 = vsel %vm974, 1, 0
        %v1005 = vsel %vm975, 1, 0
        %vm1006 = vcmp.eq.s32.totalorder %v976, 1
        %vm1007 = vcmp.eq.s32.totalorder %v977, 1
        %vm1008 = vcmp.eq.s32.totalorder %v978, 1
        %vm1009 = vcmp.eq.s32.totalorder %v979, 1
        %vm1010 = vcmp.eq.s32.totalorder %v980, 1
        %vm1011 = vcmp.eq.s32.totalorder %v981, 1
        %vm1012 = vcmp.eq.s32.totalorder %v982, 1
        %vm1013 = vcmp.eq.s32.totalorder %v983, 1
        %vm1014 = vcmp.eq.s32.totalorder %v984, 1
        %vm1015 = vcmp.eq.s32.totalorder %v985, 1
        %vm1016 = vcmp.eq.s32.totalorder %v986, 1
        %vm1017 = vcmp.eq.s32.totalorder %v987, 1
        %vm1018 = vcmp.eq.s32.totalorder %v988, 1
        %vm1019 = vcmp.eq.s32.totalorder %v989, 1
        %vm1020 = vcmp.eq.s32.totalorder %v990, 1
        %vm1021 = vcmp.eq.s32.totalorder %v991, 1
        %vm1022 = vcmp.eq.s32.totalorder %v992, 1
        %vm1023 = vcmp.eq.s32.totalorder %v993, 1
        %vm1024 = vcmp.eq.s32.totalorder %v994, 1
        %vm1025 = vcmp.eq.s32.totalorder %v995, 1
        %vm1026 = vcmp.eq.s32.totalorder %v996, 1
        %vm1027 = vcmp.eq.s32.totalorder %v997, 1
        %vm1028 = vcmp.eq.s32.totalorder %v998, 1
        %vm1029 = vcmp.eq.s32.totalorder %v999, 1
        %vm1030 = vcmp.eq.s32.totalorder %v1000, 1
        %vm1031 = vcmp.eq.s32.totalorder %v1001, 1
        %vm1032 = vcmp.eq.s32.totalorder %v1002, 1
        %vm1033 = vcmp.eq.s32.totalorder %v1003, 1
        %vm1034 = vcmp.eq.s32.totalorder %v1004, 1
        %vm1035 = vcmp.eq.s32.totalorder %v1005, 1
        %1036 = vst [vmem:[#allocation1] ss:$4 sm:$0xff] %v753
        %s1037 = scalar_lea.vmem [#allocation1], 1
        %1038 = vst [vmem:[%s1037] ss:$4 sm:$0xff] %v799
        %s1039 = scalar_lea.vmem [#allocation1], 2
        %1040 = vst [vmem:[%s1039] ss:$4 sm:$0xff] %v800
        %s1041 = scalar_lea.vmem [#allocation1], 3
        %1042 = vst [vmem:[%s1041] ss:$4 sm:$0xff] %v801
        %s1043 = scalar_lea.vmem [#allocation1], 32
        %1044 = vst [vmem:[%s1043] ss:$4 sm:$0xff] %v754
        %s1045 = scalar_lea.vmem [#allocation1], 33
        %1046 = vst [vmem:[%s1045] ss:$4 sm:$0xff] %v802
        %s1047 = scalar_lea.vmem [#allocation1], 34
        %1048 = vst [vmem:[%s1047] ss:$4 sm:$0xff] %v803
        %s1049 = scalar_lea.vmem [#allocation1], 35
        %1050 = vst [vmem:[%s1049] ss:$4 sm:$0xff] %v804
        %v1051 = vld.sshfl [vmem:[#allocation1] sm:$0xff pattern:$0x73625140]
        %v1052 = vld.sshfl [vmem:[#allocation1 + $0x20] sm:$0xff pattern:$0x73625140]
        %1053 = vst [vmem:[#allocation1] ss:$4 sm:$0xff] %v755
        %v1054 = vld.sshfl [vmem:[#allocation1] sm:$0xff pattern:$0x73625140]
        %1055 = vst [vmem:[%s1043] ss:$4 sm:$0xff] %v805
        %1056 = vst [vmem:[%s1045] ss:$4 sm:$0xff] %v806
        %1057 = vst [vmem:[%s1047] ss:$4 sm:$0xff] %v807
        %1058 = vst [vmem:[%s1049] ss:$4 sm:$0xff] %v756
        %v1059 = vld.sshfl [vmem:[#allocation1 + $0x20] sm:$0xff pattern:$0x73625140]
        %1060 = vst [vmem:[#allocation1] ss:$4 sm:$0xff] %v808
        %1061 = vst [vmem:[%s1037] ss:$4 sm:$0xff] %v809
        %1062 = vst [vmem:[%s1039] ss:$4 sm:$0xff] %v810
        %1063 = vst [vmem:[%s1041] ss:$4 sm:$0xff] %v757
        %1064 = vst [vmem:[%s1043] ss:$4 sm:$0xff] %v811
        %v1065 = vld.sshfl [vmem:[#allocation1] sm:$0xff pattern:$0x73625140]
        %v1066 = vld.sshfl [vmem:[#allocation1 + $0x20] sm:$0xff pattern:$0x73625140]
        %1067 = vst [vmem:[#allocation1] ss:$4 sm:$0xff] %v812
        %1068 = vst [vmem:[%s1037] ss:$4 sm:$0xff] %v813
        %1069 = vst [vmem:[%s1039] ss:$4 sm:$0xff] %v758
        %1070 = vst [vmem:[%s1041] ss:$4 sm:$0xff] %v814
        %1071 = vst [vmem:[%s1043] ss:$4 sm:$0xff] %v815
        %1072 = vst [vmem:[%s1045] ss:$4 sm:$0xff] %v816
        %1073 = vst [vmem:[%s1047] ss:$4 sm:$0xff] %v759
        %1074 = vst [vmem:[%s1049] ss:$4 sm:$0xff] %v817
        %v1075 = vld.sshfl [vmem:[#allocation1] sm:$0xff pattern:$0x73625140]
        %v1076 = vld.sshfl [vmem:[#allocation1 + $0x20] sm:$0xff pattern:$0x73625140]
        %1077 = vst [vmem:[#allocation1] ss:$4 sm:$0xff] %v818
        %v1078 = vld.sshfl [vmem:[#allocation1] sm:$0xff pattern:$0x73625140]
        %1079 = vst [vmem:[%s1043] ss:$4 sm:$0xff] %v819
        %1080 = vst [vmem:[%s1045] ss:$4 sm:$0xff] %v760
        %1081 = vst [vmem:[%s1047] ss:$4 sm:$0xff] %v820
        %1082 = vst [vmem:[%s1049] ss:$4 sm:$0xff] %v821
        %v1083 = vld.sshfl [vmem:[#allocation1 + $0x20] sm:$0xff pattern:$0x73625140]
        %1084 = vst [vmem:[#allocation1] ss:$4 sm:$0xff] %v822
        %1085 = vst [vmem:[%s1037] ss:$4 sm:$0xff] %v761
        %1086 = vst [vmem:[%s1039] ss:$4 sm:$0xff] %v823
        %1087 = vst [vmem:[%s1041] ss:$4 sm:$0xff] %v824
        %1088 = vst [vmem:[%s1043] ss:$4 sm:$0xff] %v825
        %v1089 = vld.sshfl [vmem:[#allocation1] sm:$0xff pattern:$0x73625140]
        %v1090 = vld.sshfl [vmem:[#allocation1 + $0x20] sm:$0xff pattern:$0x73625140]
        %1091 = vst [vmem:[#allocation1] ss:$4 sm:$0xff] %v762
        %1092 = vst [vmem:[%s1037] ss:$4 sm:$0xff] %v826
        %1093 = vst [vmem:[%s1039] ss:$4 sm:$0xff] %v827
        %1094 = vst [vmem:[%s1041] ss:$4 sm:$0xff] %v828
        %1095 = vst [vmem:[%s1043] ss:$4 sm:$0xff] %v763
        %1096 = vst [vmem:[%s1045] ss:$4 sm:$0xff] %v829
        %1097 = vst [vmem:[%s1047] ss:$4 sm:$0xff] %v830
        %1098 = vst [vmem:[%s1049] ss:$4 sm:$0xff] %v831
        %v1099 = vld.sshfl [vmem:[#allocation1] sm:$0xff pattern:$0x73625140]
        %v1100 = vld.sshfl [vmem:[#allocation1 + $0x20] sm:$0xff pattern:$0x73625140]
        %1101 = vst [vmem:[#allocation1] ss:$4 sm:$0xff] %v764
        %v1102 = vld.sshfl [vmem:[#allocation1] sm:$0xff pattern:$0x73625140]
        %1103 = vst [vmem:[%s1043] ss:$4 sm:$0xff] %v832
        %1104 = vst [vmem:[%s1045] ss:$4 sm:$0xff] %v833
        %1105 = vst [vmem:[%s1047] ss:$4 sm:$0xff] %v834
        %1106 = vst [vmem:[%s1049] ss:$4 sm:$0xff] %v765
        %v1107 = vld.sshfl [vmem:[#allocation1 + $0x20] sm:$0xff pattern:$0x73625140]
        %1108 = vst [vmem:[#allocation1] ss:$4 sm:$0xff] %v835
        %1109 = vst [vmem:[%s1037] ss:$4 sm:$0xff] %v836
        %1110 = vst [vmem:[%s1039] ss:$4 sm:$0xff] %v837
        %1111 = vst [vmem:[%s1041] ss:$4 sm:$0xff] %v766
        %1112 = vst [vmem:[%s1043] ss:$4 sm:$0xff] %v838
        %v1113 = vld.sshfl [vmem:[#allocation1] sm:$0xff pattern:$0x73625140]
        %v1114 = vld.sshfl [vmem:[#allocation1 + $0x20] sm:$0xff pattern:$0x73625140]
        %1115 = vst [vmem:[#allocation1] ss:$4 sm:$0xff] %v839
        %1116 = vst [vmem:[%s1037] ss:$4 sm:$0xff] %v840
        %1117 = vst [vmem:[%s1039] ss:$4 sm:$0xff] %v767
        %1118 = vst [vmem:[%s1041] ss:$4 sm:$0xff] %v841
        %1119 = vst [vmem:[%s1043] ss:$4 sm:$0xff] %v842
        %1120 = vst [vmem:[%s1045] ss:$4 sm:$0xff] %v843
        %1121 = vst [vmem:[%s1047] ss:$4 sm:$0xff] %v768
        %1122 = vst [vmem:[%s1049] ss:$4 sm:$0xff] %v844
        %v1123 = vld.sshfl [vmem:[#allocation1] sm:$0xff pattern:$0x73625140]
        %v1124 = vld.sshfl [vmem:[#allocation1 + $0x20] sm:$0xff pattern:$0x73625140]
        %1125 = vst [vmem:[#allocation1] ss:$4 sm:$0xff] %v845
        %v1126 = vld.sshfl [vmem:[#allocation1] sm:$0xff pattern:$0x73625140]
        %1127 = vst [vmem:[%s1043] ss:$4 sm:$0xff] %v846
        %1128 = vst [vmem:[%s1045] ss:$4 sm:$0xff] %v769
        %1129 = vst [vmem:[%s1047] ss:$4 sm:$0xff] %v847
        %1130 = vst [vmem:[%s1049] ss:$4 sm:$0xff] %v848
        %v1131 = vld.sshfl [vmem:[#allocation1 + $0x20] sm:$0xff pattern:$0x73625140]
        %1132 = vst [vmem:[#allocation1] ss:$4 sm:$0xff] %v849
        %1133 = vst [vmem:[%s1037] ss:$4 sm:$0xff] %v770
        %1134 = vst [vmem:[%s1039] ss:$4 sm:$0xff] %v850
        %1135 = vst [vmem:[%s1041] ss:$4 sm:$0xff] %v851
        %1136 = vst [vmem:[%s1043] ss:$4 sm:$0xff] %v852
        %v1137 = vld.sshfl [vmem:[#allocation1] sm:$0xff pattern:$0x73625140]
        %v1138 = vld.sshfl [vmem:[#allocation1 + $0x20] sm:$0xff pattern:$0x73625140]
        %1139 = vst [vmem:[#allocation1] ss:$4 sm:$0xff] %v771
        %1140 = vst [vmem:[%s1037] ss:$4 sm:$0xff] %v853
        %1141 = vst [vmem:[%s1039] ss:$4 sm:$0xff] %v854
        %1142 = vst [vmem:[%s1041] ss:$4 sm:$0xff] %v855
        %1143 = vst [vmem:[%s1043] ss:$4 sm:$0xff] %v772
        %1144 = vst [vmem:[%s1045] ss:$4 sm:$0xff] %v856
        %1145 = vst [vmem:[%s1047] ss:$4 sm:$0xff] %v857
        %1146 = vst [vmem:[%s1049] ss:$4 sm:$0xff] %v858
        %v1147 = vld.sshfl [vmem:[#allocation1] sm:$0xff pattern:$0x73625140]
        %v1148 = vld.sshfl [vmem:[#allocation1 + $0x20] sm:$0xff pattern:$0x73625140]
        %1149 = vst [vmem:[#allocation1] ss:$4 sm:$0xff] %v773
        %v1150 = vld.sshfl [vmem:[#allocation1] sm:$0xff pattern:$0x73625140]
        %1151 = vst [vmem:[%s1043] ss:$4 sm:$0xff] %v859
        %1152 = vst [vmem:[%s1045] ss:$4 sm:$0xff] %v860
        %1153 = vst [vmem:[%s1047] ss:$4 sm:$0xff] %v861
        %1154 = vst [vmem:[%s1049] ss:$4 sm:$0xff] %v774
        %v1155 = vld.sshfl [vmem:[#allocation1 + $0x20] sm:$0xff pattern:$0x73625140]
        %1156 = vst [vmem:[#allocation1] ss:$4 sm:$0xff] %v862
        %1157 = vst [vmem:[%s1037] ss:$4 sm:$0xff] %v863
        %1158 = vst [vmem:[%s1039] ss:$4 sm:$0xff] %v864
        %1159 = vst [vmem:[%s1041] ss:$4 sm:$0xff] %v775
        %1160 = vst [vmem:[%s1043] ss:$4 sm:$0xff] %v865
        %v1161 = vld.sshfl [vmem:[#allocation1] sm:$0xff pattern:$0x73625140]
        %v1162 = vld.sshfl [vmem:[#allocation1 + $0x20] sm:$0xff pattern:$0x73625140]
        %v1193 = vsel %vm1006, 0.0, %v1051
        %v1194 = vsel %vm1007, 0.0, %v1052
        %v1195 = vsel %vm1008, 0.0, %v1054
        %v1196 = vsel %vm1009, 0.0, %v1059
        %v1197 = vsel %vm1010, 0.0, %v1065
        %v1198 = vsel %vm1011, 0.0, %v1066
        %v1199 = vsel %vm1012, 0.0, %v1075
        %v1200 = vsel %vm1013, 0.0, %v1076
        %v1201 = vsel %vm1014, 0.0, %v1078
        %v1202 = vsel %vm1015, 0.0, %v1083
        %v1203 = vsel %vm1016, 0.0, %v1089
        %v1204 = vsel %vm1017, 0.0, %v1090
        %v1205 = vsel %vm1018, 0.0, %v1099
        %v1206 = vsel %vm1019, 0.0, %v1100
        %v1207 = vsel %vm1020, 0.0, %v1102
        %v1208 = vsel %vm1021, 0.0, %v1107
        %v1209 = vsel %vm1022, 0.0, %v1113
        %v1210 = vsel %vm1023, 0.0, %v1114
        %v1211 = vsel %vm1024, 0.0, %v1123
        %v1212 = vsel %vm1025, 0.0, %v1124
        %v1213 = vsel %vm1026, 0.0, %v1126
        %v1214 = vsel %vm1027, 0.0, %v1131
        %v1215 = vsel %vm1028, 0.0, %v1137
        %v1216 = vsel %vm1029, 0.0, %v1138
        %v1217 = vsel %vm1030, 0.0, %v1147
        %v1218 = vsel %vm1031, 0.0, %v1148
        %v1219 = vsel %vm1032, 0.0, %v1150
        %v1220 = vsel %vm1033, 0.0, %v1155
        %v1221 = vsel %vm1034, 0.0, %v1161
        %v1222 = vsel %vm1035, 0.0, %v1162
        %v1223 = vld [vmem:[%s3] sm:$0x7]
        %v1224 = vld [vmem:[%s3 + $0x4] sm:$0x7]
        %v1225 = vld [vmem:[%s3 + $0x8] sm:$0x7]
        %v1226 = vperm.slane %v1223, 0
        %v1227 = vmul.f32 %v1193, %v1226
        %v1228 = vmul.f32 %v1194, %v1226
        %v1229 = vmul.f32 %v1196, %v1226
        %v1230 = vmul.f32 %v1197, %v1226
        %v1231 = vmul.f32 %v1199, %v1226
        %v1232 = vmul.f32 %v1200, %v1226
        %v1233 = vmul.f32 %v1202, %v1226
        %v1234 = vmul.f32 %v1203, %v1226
        %v1235 = vmul.f32 %v1205, %v1226
        %v1236 = vmul.f32 %v1206, %v1226
        %v1237 = vmul.f32 %v1208, %v1226
        %v1238 = vmul.f32 %v1209, %v1226
        %v1239 = vmul.f32 %v1211, %v1226
        %v1240 = vmul.f32 %v1212, %v1226
        %v1241 = vmul.f32 %v1214, %v1226
        %v1242 = vmul.f32 %v1215, %v1226
        %v1243 = vadd.f32 %v1227, 0.0
        %v1244 = vadd.f32 %v1228, 0.0
        %v1245 = vadd.f32 %v1229, 0.0
        %v1246 = vadd.f32 %v1230, 0.0
        %v1247 = vadd.f32 %v1231, 0.0
        %v1248 = vadd.f32 %v1232, 0.0
        %v1249 = vadd.f32 %v1233, 0.0
        %v1250 = vadd.f32 %v1234, 0.0
        %v1251 = vadd.f32 %v1235, 0.0
        %v1252 = vadd.f32 %v1236, 0.0
        %v1253 = vadd.f32 %v1237, 0.0
        %v1254 = vadd.f32 %v1238, 0.0
        %v1255 = vadd.f32 %v1239, 0.0
        %v1256 = vadd.f32 %v1240, 0.0
        %v1257 = vadd.f32 %v1241, 0.0
        %v1258 = vadd.f32 %v1242, 0.0
        %v1259 = vperm.slane %v1223, 1
        %v1260 = vmul.f32 %v1193, %v1259
        %v1261 = vmul.f32 %v1194, %v1259
        %v1262 = vmul.f32 %v1195, %v1259
        %v1263 = vmul.f32 %v1196, %v1259
        %v1264 = vmul.f32 %v1197, %v1259
        %v1265 = vmul.f32 %v1198, %v1259
        %v1266 = vmul.f32 %v1199, %v1259
        %v1267 = vmul.f32 %v1200, %v1259
        %v1268 = vmul.f32 %v1201, %v1259
        %v1269 = vmul.f32 %v1202, %v1259
        %v1270 = vmul.f32 %v1203, %v1259
        %v1271 = vmul.f32 %v1204, %v1259
        %v1272 = vmul.f32 %v1205, %v1259
        %v1273 = vmul.f32 %v1206, %v1259
        %v1274 = vmul.f32 %v1207, %v1259
        %v1275 = vmul.f32 %v1208, %v1259
        %v1276 = vmul.f32 %v1209, %v1259
        %v1277 = vmul.f32 %v1210, %v1259
        %v1278 = vmul.f32 %v1211, %v1259
        %v1279 = vmul.f32 %v1212, %v1259
        %v1280 = vmul.f32 %v1213, %v1259
        %v1281 = vmul.f32 %v1214, %v1259
        %v1282 = vmul.f32 %v1215, %v1259
        %v1283 = vmul.f32 %v1216, %v1259
        %vm1308 = vcmask 1046528
        %v1309 = vrot.slane %v1260, 1
        %v1310 = vrot.slane %v1261, 1
        %v1311 = vsel %vm1308, %v1309, %v1310
        %v1312 = vrot.slane %v1262, 1
        %v1313 = vsel %vm1308, %v1310, %v1312
        %v1314 = vrot.slane %v1263, 1
        %v1315 = vrot.slane %v1264, 1
        %v1316 = vsel %vm1308, %v1314, %v1315
        %v1317 = vrot.slane %v1265, 1
        %v1318 = vsel %vm1308, %v1315, %v1317
        %v1319 = vrot.slane %v1266, 1
        %v1320 = vrot.slane %v1267, 1
        %v1321 = vsel %vm1308, %v1319, %v1320
        %v1322 = vrot.slane %v1268, 1
        %v1323 = vsel %vm1308, %v1320, %v1322
        %v1324 = vrot.slane %v1269, 1
        %v1325 = vrot.slane %v1270, 1
        %v1326 = vsel %vm1308, %v1324, %v1325
        %v1327 = vrot.slane %v1271, 1
        %v1328 = vsel %vm1308, %v1325, %v1327
        %v1329 = vrot.slane %v1272, 1
        %v1330 = vrot.slane %v1273, 1
        %v1331 = vsel %vm1308, %v1329, %v1330
        %v1332 = vrot.slane %v1274, 1
        %v1333 = vsel %vm1308, %v1330, %v1332
        %v1334 = vrot.slane %v1275, 1
        %v1335 = vrot.slane %v1276, 1
        %v1336 = vsel %vm1308, %v1334, %v1335
        %v1337 = vrot.slane %v1277, 1
        %v1338 = vsel %vm1308, %v1335, %v1337
        %v1339 = vrot.slane %v1278, 1
        %v1340 = vrot.slane %v1279, 1
        %v1341 = vsel %vm1308, %v1339, %v1340
        %v1342 = vrot.slane %v1280, 1
        %v1343 = vsel %vm1308, %v1340, %v1342
        %v1344 = vrot.slane %v1281, 1
        %v1345 = vrot.slane %v1282, 1
        %v1346 = vsel %vm1308, %v1344, %v1345
        %v1347 = vrot.slane %v1283, 1
        %v1348 = vsel %vm1308, %v1345, %v1347
        %v1365 = vadd.f32 %v1243, %v1311
        %v1366 = vadd.f32 %v1244, %v1313
        %v1367 = vadd.f32 %v1245, %v1316
        %v1368 = vadd.f32 %v1246, %v1318
        %v1369 = vadd.f32 %v1247, %v1321
        %v1370 = vadd.f32 %v1248, %v1323
        %v1371 = vadd.f32 %v1249, %v1326
        %v1372 = vadd.f32 %v1250, %v1328
        %v1373 = vadd.f32 %v1251, %v1331
        %v1374 = vadd.f32 %v1252, %v1333
        %v1375 = vadd.f32 %v1253, %v1336
        %v1376 = vadd.f32 %v1254, %v1338
        %v1377 = vadd.f32 %v1255, %v1341
        %v1378 = vadd.f32 %v1256, %v1343
        %v1379 = vadd.f32 %v1257, %v1346
        %v1380 = vadd.f32 %v1258, %v1348
        %v1381 = vperm.slane %v1223, 2
        %v1382 = vmul.f32 %v1193, %v1381
        %v1383 = vmul.f32 %v1194, %v1381
        %v1384 = vmul.f32 %v1195, %v1381
        %v1385 = vmul.f32 %v1196, %v1381
        %v1386 = vmul.f32 %v1197, %v1381
        %v1387 = vmul.f32 %v1198, %v1381
        %v1388 = vmul.f32 %v1199, %v1381
        %v1389 = vmul.f32 %v1200, %v1381
        %v1390 = vmul.f32 %v1201, %v1381
        %v1391 = vmul.f32 %v1202, %v1381
        %v1392 = vmul.f32 %v1203, %v1381
        %v1393 = vmul.f32 %v1204, %v1381
        %v1394 = vmul.f32 %v1205, %v1381
        %v1395 = vmul.f32 %v1206, %v1381
        %v1396 = vmul.f32 %v1207, %v1381
        %v1397 = vmul.f32 %v1208, %v1381
        %v1398 = vmul.f32 %v1209, %v1381
        %v1399 = vmul.f32 %v1210, %v1381
        %v1400 = vmul.f32 %v1211, %v1381
        %v1401 = vmul.f32 %v1212, %v1381
        %v1402 = vmul.f32 %v1213, %v1381
        %v1403 = vmul.f32 %v1214, %v1381
        %v1404 = vmul.f32 %v1215, %v1381
        %v1405 = vmul.f32 %v1216, %v1381
        %vm1430 = vcmask 1045504
        %v1431 = vrot.slane %v1382, 2
        %v1432 = vrot.slane %v1383, 2
        %v1433 = vsel %vm1430, %v1431, %v1432
        %v1434 = vrot.slane %v1384, 2
        %v1435 = vsel %vm1430, %v1432, %v1434
        %v1436 = vrot.slane %v1385, 2
        %v1437 = vrot.slane %v1386, 2
        %v1438 = vsel %vm1430, %v1436, %v1437
        %v1439 = vrot.slane %v1387, 2
        %v1440 = vsel %vm1430, %v1437, %v1439
        %v1441 = vrot.slane %v1388, 2
        %v1442 = vrot.slane %v1389, 2
        %v1443 = vsel %vm1430, %v1441, %v1442
        %v1444 = vrot.slane %v1390, 2
        %v1445 = vsel %vm1430, %v1442, %v1444
        %v1446 = vrot.slane %v1391, 2
        %v1447 = vrot.slane %v1392, 2
        %v1448 = vsel %vm1430, %v1446, %v1447
        %v1449 = vrot.slane %v1393, 2
        %v1450 = vsel %vm1430, %v1447, %v1449
        %v1451 = vrot.slane %v1394, 2
        %v1452 = vrot.slane %v1395, 2
        %v1453 = vsel %vm1430, %v1451, %v1452
        %v1454 = vrot.slane %v1396, 2
        %v1455 = vsel %vm1430, %v1452, %v1454
        %v1456 = vrot.slane %v1397, 2
        %v1457 = vrot.slane %v1398, 2
        %v1458 = vsel %vm1430, %v1456, %v1457
        %v1459 = vrot.slane %v1399, 2
        %v1460 = vsel %vm1430, %v1457, %v1459
        %v1461 = vrot.slane %v1400, 2
        %v1462 = vrot.slane %v1401, 2
        %v1463 = vsel %vm1430, %v1461, %v1462
        %v1464 = vrot.slane %v1402, 2
        %v1465 = vsel %vm1430, %v1462, %v1464
        %v1466 = vrot.slane %v1403, 2
        %v1467 = vrot.slane %v1404, 2
        %v1468 = vsel %vm1430, %v1466, %v1467
        %v1469 = vrot.slane %v1405, 2
        %v1470 = vsel %vm1430, %v1467, %v1469
        %v1487 = vadd.f32 %v1365, %v1433
        %v1488 = vadd.f32 %v1366, %v1435
        %v1489 = vadd.f32 %v1367, %v1438
        %v1490 = vadd.f32 %v1368, %v1440
        %v1491 = vadd.f32 %v1369, %v1443
        %v1492 = vadd.f32 %v1370, %v1445
        %v1493 = vadd.f32 %v1371, %v1448
        %v1494 = vadd.f32 %v1372, %v1450
        %v1495 = vadd.f32 %v1373, %v1453
        %v1496 = vadd.f32 %v1374, %v1455
        %v1497 = vadd.f32 %v1375, %v1458
        %v1498 = vadd.f32 %v1376, %v1460
        %v1499 = vadd.f32 %v1377, %v1463
        %v1500 = vadd.f32 %v1378, %v1465
        %v1501 = vadd.f32 %v1379, %v1468
        %v1502 = vadd.f32 %v1380, %v1470
        %v1503 = vperm.slane %v1224, 0
        %v1504 = vmul.f32 %v1196, %v1503
        %v1505 = vmul.f32 %v1197, %v1503
        %v1506 = vmul.f32 %v1199, %v1503
        %v1507 = vmul.f32 %v1200, %v1503
        %v1508 = vmul.f32 %v1202, %v1503
        %v1509 = vmul.f32 %v1203, %v1503
        %v1510 = vmul.f32 %v1205, %v1503
        %v1511 = vmul.f32 %v1206, %v1503
        %v1512 = vmul.f32 %v1208, %v1503
        %v1513 = vmul.f32 %v1209, %v1503
        %v1514 = vmul.f32 %v1211, %v1503
        %v1515 = vmul.f32 %v1212, %v1503
        %v1516 = vmul.f32 %v1214, %v1503
        %v1517 = vmul.f32 %v1215, %v1503
        %v1518 = vmul.f32 %v1217, %v1503
        %v1519 = vmul.f32 %v1218, %v1503
        %v1520 = vadd.f32 %v1487, %v1504
        %v1521 = vadd.f32 %v1488, %v1505
        %v1522 = vadd.f32 %v1489, %v1506
        %v1523 = vadd.f32 %v1490, %v1507
        %v1524 = vadd.f32 %v1491, %v1508
        %v1525 = vadd.f32 %v1492, %v1509
        %v1526 = vadd.f32 %v1493, %v1510
        %v1527 = vadd.f32 %v1494, %v1511
        %v1528 = vadd.f32 %v1495, %v1512
        %v1529 = vadd.f32 %v1496, %v1513
        %v1530 = vadd.f32 %v1497, %v1514
        %v1531 = vadd.f32 %v1498, %v1515
        %v1532 = vadd.f32 %v1499, %v1516
        %v1533 = vadd.f32 %v1500, %v1517
        %v1534 = vadd.f32 %v1501, %v1518
        %v1535 = vadd.f32 %v1502, %v1519
        %v1536 = vperm.slane %v1224, 1
        %v1537 = vmul.f32 %v1196, %v1536
        %v1538 = vmul.f32 %v1197, %v1536
        %v1539 = vmul.f32 %v1198, %v1536
        %v1540 = vmul.f32 %v1199, %v1536
        %v1541 = vmul.f32 %v1200, %v1536
        %v1542 = vmul.f32 %v1201, %v1536
        %v1543 = vmul.f32 %v1202, %v1536
        %v1544 = vmul.f32 %v1203, %v1536
        %v1545 = vmul.f32 %v1204, %v1536
        %v1546 = vmul.f32 %v1205, %v1536
        %v1547 = vmul.f32 %v1206, %v1536
        %v1548 = vmul.f32 %v1207, %v1536
        %v1549 = vmul.f32 %v1208, %v1536
        %v1550 = vmul.f32 %v1209, %v1536
        %v1551 = vmul.f32 %v1210, %v1536
        %v1552 = vmul.f32 %v1211, %v1536
        %v1553 = vmul.f32 %v1212, %v1536
        %v1554 = vmul.f32 %v1213, %v1536
        %v1555 = vmul.f32 %v1214, %v1536
        %v1556 = vmul.f32 %v1215, %v1536
        %v1557 = vmul.f32 %v1216, %v1536
        %v1558 = vmul.f32 %v1217, %v1536
        %v1559 = vmul.f32 %v1218, %v1536
        %v1560 = vmul.f32 %v1219, %v1536
        %v1585 = vrot.slane %v1537, 1
        %v1586 = vrot.slane %v1538, 1
        %v1587 = vsel %vm1308, %v1585, %v1586
        %v1588 = vrot.slane %v1539, 1
        %v1589 = vsel %vm1308, %v1586, %v1588
        %v1590 = vrot.slane %v1540, 1
        %v1591 = vrot.slane %v1541, 1
        %v1592 = vsel %vm1308, %v1590, %v1591
        %v1593 = vrot.slane %v1542, 1
        %v1594 = vsel %vm1308, %v1591, %v1593
        %v1595 = vrot.slane %v1543, 1
        %v1596 = vrot.slane %v1544, 1
        %v1597 = vsel %vm1308, %v1595, %v1596
        %v1598 = vrot.slane %v1545, 1
        %v1599 = vsel %vm1308, %v1596, %v1598
        %v1600 = vrot.slane %v1546, 1
        %v1601 = vrot.slane %v1547, 1
        %v1602 = vsel %vm1308, %v1600, %v1601
        %v1603 = vrot.slane %v1548, 1
        %v1604 = vsel %vm1308, %v1601, %v1603
        %v1605 = vrot.slane %v1549, 1
        %v1606 = vrot.slane %v1550, 1
        %v1607 = vsel %vm1308, %v1605, %v1606
        %v1608 = vrot.slane %v1551, 1
        %v1609 = vsel %vm1308, %v1606, %v1608
        %v1610 = vrot.slane %v1552, 1
        %v1611 = vrot.slane %v1553, 1
        %v1612 = vsel %vm1308, %v1610, %v1611
        %v1613 = vrot.slane %v1554, 1
        %v1614 = vsel %vm1308, %v1611, %v1613
        %v1615 = vrot.slane %v1555, 1
        %v1616 = vrot.slane %v1556, 1
        %v1617 = vsel %vm1308, %v1615, %v1616
        %v1618 = vrot.slane %v1557, 1
        %v1619 = vsel %vm1308, %v1616, %v1618
        %v1620 = vrot.slane %v1558, 1
        %v1621 = vrot.slane %v1559, 1
        %v1622 = vsel %vm1308, %v1620, %v1621
        %v1623 = vrot.slane %v1560, 1
        %v1624 = vsel %vm1308, %v1621, %v1623
        %v1641 = vadd.f32 %v1520, %v1587
        %v1642 = vadd.f32 %v1521, %v1589
        %v1643 = vadd.f32 %v1522, %v1592
        %v1644 = vadd.f32 %v1523, %v1594
        %v1645 = vadd.f32 %v1524, %v1597
        %v1646 = vadd.f32 %v1525, %v1599
        %v1647 = vadd.f32 %v1526, %v1602
        %v1648 = vadd.f32 %v1527, %v1604
        %v1649 = vadd.f32 %v1528, %v1607
        %v1650 = vadd.f32 %v1529, %v1609
        %v1651 = vadd.f32 %v1530, %v1612
        %v1652 = vadd.f32 %v1531, %v1614
        %v1653 = vadd.f32 %v1532, %v1617
        %v1654 = vadd.f32 %v1533, %v1619
        %v1655 = vadd.f32 %v1534, %v1622
        %v1656 = vadd.f32 %v1535, %v1624
        %v1657 = vperm.slane %v1224, 2
        %v1658 = vmul.f32 %v1196, %v1657
        %v1659 = vmul.f32 %v1197, %v1657
        %v1660 = vmul.f32 %v1198, %v1657
        %v1661 = vmul.f32 %v1199, %v1657
        %v1662 = vmul.f32 %v1200, %v1657
        %v1663 = vmul.f32 %v1201, %v1657
        %v1664 = vmul.f32 %v1202, %v1657
        %v1665 = vmul.f32 %v1203, %v1657
        %v1666 = vmul.f32 %v1204, %v1657
        %v1667 = vmul.f32 %v1205, %v1657
        %v1668 = vmul.f32 %v1206, %v1657
        %v1669 = vmul.f32 %v1207, %v1657
        %v1670 = vmul.f32 %v1208, %v1657
        %v1671 = vmul.f32 %v1209, %v1657
        %v1672 = vmul.f32 %v1210, %v1657
        %v1673 = vmul.f32 %v1211, %v1657
        %v1674 = vmul.f32 %v1212, %v1657
        %v1675 = vmul.f32 %v1213, %v1657
        %v1676 = vmul.f32 %v1214, %v1657
        %v1677 = vmul.f32 %v1215, %v1657
        %v1678 = vmul.f32 %v1216, %v1657
        %v1679 = vmul.f32 %v1217, %v1657
        %v1680 = vmul.f32 %v1218, %v1657
        %v1681 = vmul.f32 %v1219, %v1657
        %v1706 = vrot.slane %v1658, 2
        %v1707 = vrot.slane %v1659, 2
        %v1708 = vsel %vm1430, %v1706, %v1707
        %v1709 = vrot.slane %v1660, 2
        %v1710 = vsel %vm1430, %v1707, %v1709
        %v1711 = vrot.slane %v1661, 2
        %v1712 = vrot.slane %v1662, 2
        %v1713 = vsel %vm1430, %v1711, %v1712
        %v1714 = vrot.slane %v1663, 2
        %v1715 = vsel %vm1430, %v1712, %v1714
        %v1716 = vrot.slane %v1664, 2
        %v1717 = vrot.slane %v1665, 2
        %v1718 = vsel %vm1430, %v1716, %v1717
        %v1719 = vrot.slane %v1666, 2
        %v1720 = vsel %vm1430, %v1717, %v1719
        %v1721 = vrot.slane %v1667, 2
        %v1722 = vrot.slane %v1668, 2
        %v1723 = vsel %vm1430, %v1721, %v1722
        %v1724 = vrot.slane %v1669, 2
        %v1725 = vsel %vm1430, %v1722, %v1724
        %v1726 = vrot.slane %v1670, 2
        %v1727 = vrot.slane %v1671, 2
        %v1728 = vsel %vm1430, %v1726, %v1727
        %v1729 = vrot.slane %v1672, 2
        %v1730 = vsel %vm1430, %v1727, %v1729
        %v1731 = vrot.slane %v1673, 2
        %v1732 = vrot.slane %v1674, 2
        %v1733 = vsel %vm1430, %v1731, %v1732
        %v1734 = vrot.slane %v1675, 2
        %v1735 = vsel %vm1430, %v1732, %v1734
        %v1736 = vrot.slane %v1676, 2
        %v1737 = vrot.slane %v1677, 2
        %v1738 = vsel %vm1430, %v1736, %v1737
        %v1739 = vrot.slane %v1678, 2
        %v1740 = vsel %vm1430, %v1737, %v1739
        %v1741 = vrot.slane %v1679, 2
        %v1742 = vrot.slane %v1680, 2
        %v1743 = vsel %vm1430, %v1741, %v1742
        %v1744 = vrot.slane %v1681, 2
        %v1745 = vsel %vm1430, %v1742, %v1744
        %v1762 = vadd.f32 %v1641, %v1708
        %v1763 = vadd.f32 %v1642, %v1710
        %v1764 = vadd.f32 %v1643, %v1713
        %v1765 = vadd.f32 %v1644, %v1715
        %v1766 = vadd.f32 %v1645, %v1718
        %v1767 = vadd.f32 %v1646, %v1720
        %v1768 = vadd.f32 %v1647, %v1723
        %v1769 = vadd.f32 %v1648, %v1725
        %v1770 = vadd.f32 %v1649, %v1728
        %v1771 = vadd.f32 %v1650, %v1730
        %v1772 = vadd.f32 %v1651, %v1733
        %v1773 = vadd.f32 %v1652, %v1735
        %v1774 = vadd.f32 %v1653, %v1738
        %v1775 = vadd.f32 %v1654, %v1740
        %v1776 = vadd.f32 %v1655, %v1743
        %v1777 = vadd.f32 %v1656, %v1745
        %v1778 = vperm.slane %v1225, 0
        %v1779 = vmul.f32 %v1199, %v1778
        %v1780 = vmul.f32 %v1200, %v1778
        %v1781 = vmul.f32 %v1202, %v1778
        %v1782 = vmul.f32 %v1203, %v1778
        %v1783 = vmul.f32 %v1205, %v1778
        %v1784 = vmul.f32 %v1206, %v1778
        %v1785 = vmul.f32 %v1208, %v1778
        %v1786 = vmul.f32 %v1209, %v1778
        %v1787 = vmul.f32 %v1211, %v1778
        %v1788 = vmul.f32 %v1212, %v1778
        %v1789 = vmul.f32 %v1214, %v1778
        %v1790 = vmul.f32 %v1215, %v1778
        %v1791 = vmul.f32 %v1217, %v1778
        %v1792 = vmul.f32 %v1218, %v1778
        %v1793 = vmul.f32 %v1220, %v1778
        %v1794 = vmul.f32 %v1221, %v1778
        %v1795 = vadd.f32 %v1762, %v1779
        %v1796 = vadd.f32 %v1763, %v1780
        %v1797 = vadd.f32 %v1764, %v1781
        %v1798 = vadd.f32 %v1765, %v1782
        %v1799 = vadd.f32 %v1766, %v1783
        %v1800 = vadd.f32 %v1767, %v1784
        %v1801 = vadd.f32 %v1768, %v1785
        %v1802 = vadd.f32 %v1769, %v1786
        %v1803 = vadd.f32 %v1770, %v1787
        %v1804 = vadd.f32 %v1771, %v1788
        %v1805 = vadd.f32 %v1772, %v1789
        %v1806 = vadd.f32 %v1773, %v1790
        %v1807 = vadd.f32 %v1774, %v1791
        %v1808 = vadd.f32 %v1775, %v1792
        %v1809 = vadd.f32 %v1776, %v1793
        %v1810 = vadd.f32 %v1777, %v1794
        %v1811 = vperm.slane %v1225, 1
        %v1812 = vmul.f32 %v1199, %v1811
        %v1813 = vmul.f32 %v1200, %v1811
        %v1814 = vmul.f32 %v1201, %v1811
        %v1815 = vmul.f32 %v1202, %v1811
        %v1816 = vmul.f32 %v1203, %v1811
        %v1817 = vmul.f32 %v1204, %v1811
        %v1818 = vmul.f32 %v1205, %v1811
        %v1819 = vmul.f32 %v1206, %v1811
        %v1820 = vmul.f32 %v1207, %v1811
        %v1821 = vmul.f32 %v1208, %v1811
        %v1822 = vmul.f32 %v1209, %v1811
        %v1823 = vmul.f32 %v1210, %v1811
        %v1824 = vmul.f32 %v1211, %v1811
        %v1825 = vmul.f32 %v1212, %v1811
        %v1826 = vmul.f32 %v1213, %v1811
        %v1827 = vmul.f32 %v1214, %v1811
        %v1828 = vmul.f32 %v1215, %v1811
        %v1829 = vmul.f32 %v1216, %v1811
        %v1830 = vmul.f32 %v1217, %v1811
        %v1831 = vmul.f32 %v1218, %v1811
        %v1832 = vmul.f32 %v1219, %v1811
        %v1833 = vmul.f32 %v1220, %v1811
        %v1834 = vmul.f32 %v1221, %v1811
        %v1835 = vmul.f32 %v1222, %v1811
        %v1860 = vrot.slane %v1812, 1
        %v1861 = vrot.slane %v1813, 1
        %v1862 = vsel %vm1308, %v1860, %v1861
        %v1863 = vrot.slane %v1814, 1
        %v1864 = vsel %vm1308, %v1861, %v1863
        %v1865 = vrot.slane %v1815, 1
        %v1866 = vrot.slane %v1816, 1
        %v1867 = vsel %vm1308, %v1865, %v1866
        %v1868 = vrot.slane %v1817, 1
        %v1869 = vsel %vm1308, %v1866, %v1868
        %v1870 = vrot.slane %v1818, 1
        %v1871 = vrot.slane %v1819, 1
        %v1872 = vsel %vm1308, %v1870, %v1871
        %v1873 = vrot.slane %v1820, 1
        %v1874 = vsel %vm1308, %v1871, %v1873
        %v1875 = vrot.slane %v1821, 1
        %v1876 = vrot.slane %v1822, 1
        %v1877 = vsel %vm1308, %v1875, %v1876
        %v1878 = vrot.slane %v1823, 1
        %v1879 = vsel %vm1308, %v1876, %v1878
        %v1880 = vrot.slane %v1824, 1
        %v1881 = vrot.slane %v1825, 1
        %v1882 = vsel %vm1308, %v1880, %v1881
        %v1883 = vrot.slane %v1826, 1
        %v1884 = vsel %vm1308, %v1881, %v1883
        %v1885 = vrot.slane %v1827, 1
        %v1886 = vrot.slane %v1828, 1
        %v1887 = vsel %vm1308, %v1885, %v1886
        %v1888 = vrot.slane %v1829, 1
        %v1889 = vsel %vm1308, %v1886, %v1888
        %v1890 = vrot.slane %v1830, 1
        %v1891 = vrot.slane %v1831, 1
        %v1892 = vsel %vm1308, %v1890, %v1891
        %v1893 = vrot.slane %v1832, 1
        %v1894 = vsel %vm1308, %v1891, %v1893
        %v1895 = vrot.slane %v1833, 1
        %v1896 = vrot.slane %v1834, 1
        %v1897 = vsel %vm1308, %v1895, %v1896
        %v1898 = vrot.slane %v1835, 1
        %v1899 = vsel %vm1308, %v1896, %v1898
        %v1916 = vadd.f32 %v1795, %v1862
        %v1917 = vadd.f32 %v1796, %v1864
        %v1918 = vadd.f32 %v1797, %v1867
        %v1919 = vadd.f32 %v1798, %v1869
        %v1920 = vadd.f32 %v1799, %v1872
        %v1921 = vadd.f32 %v1800, %v1874
        %v1922 = vadd.f32 %v1801, %v1877
        %v1923 = vadd.f32 %v1802, %v1879
        %v1924 = vadd.f32 %v1803, %v1882
        %v1925 = vadd.f32 %v1804, %v1884
        %v1926 = vadd.f32 %v1805, %v1887
        %v1927 = vadd.f32 %v1806, %v1889
        %v1928 = vadd.f32 %v1807, %v1892
        %v1929 = vadd.f32 %v1808, %v1894
        %v1930 = vadd.f32 %v1809, %v1897
        %v1931 = vadd.f32 %v1810, %v1899
        %v1932 = vperm.slane %v1225, 2
        %v1933 = vmul.f32 %v1199, %v1932
        %v1934 = vmul.f32 %v1200, %v1932
        %v1935 = vmul.f32 %v1201, %v1932
        %v1936 = vmul.f32 %v1202, %v1932
        %v1937 = vmul.f32 %v1203, %v1932
        %v1938 = vmul.f32 %v1204, %v1932
        %v1939 = vmul.f32 %v1205, %v1932
        %v1940 = vmul.f32 %v1206, %v1932
        %v1941 = vmul.f32 %v1207, %v1932
        %v1942 = vmul.f32 %v1208, %v1932
        %v1943 = vmul.f32 %v1209, %v1932
        %v1944 = vmul.f32 %v1210, %v1932
        %v1945 = vmul.f32 %v1211, %v1932
        %v1946 = vmul.f32 %v1212, %v1932
        %v1947 = vmul.f32 %v1213, %v1932
        %v1948 = vmul.f32 %v1214, %v1932
        %v1949 = vmul.f32 %v1215, %v1932
        %v1950 = vmul.f32 %v1216, %v1932
        %v1951 = vmul.f32 %v1217, %v1932
        %v1952 = vmul.f32 %v1218, %v1932
        %v1953 = vmul.f32 %v1219, %v1932
        %v1954 = vmul.f32 %v1220, %v1932
        %v1955 = vmul.f32 %v1221, %v1932
        %v1956 = vmul.f32 %v1222, %v1932
        %v1981 = vrot.slane %v1933, 2
        %v1982 = vrot.slane %v1934, 2
        %v1983 = vsel %vm1430, %v1981, %v1982
        %v1984 = vrot.slane %v1935, 2
        %v1985 = vsel %vm1430, %v1982, %v1984
        %v1986 = vrot.slane %v1936, 2
        %v1987 = vrot.slane %v1937, 2
        %v1988 = vsel %vm1430, %v1986, %v1987
        %v1989 = vrot.slane %v1938, 2
        %v1990 = vsel %vm1430, %v1987, %v1989
        %v1991 = vrot.slane %v1939, 2
        %v1992 = vrot.slane %v1940, 2
        %v1993 = vsel %vm1430, %v1991, %v1992
        %v1994 = vrot.slane %v1941, 2
        %v1995 = vsel %vm1430, %v1992, %v1994
        %v1996 = vrot.slane %v1942, 2
        %v1997 = vrot.slane %v1943, 2
        %v1998 = vsel %vm1430, %v1996, %v1997
        %v1999 = vrot.slane %v1944, 2
        %v2000 = vsel %vm1430, %v1997, %v1999
        %v2001 = vrot.slane %v1945, 2
        %v2002 = vrot.slane %v1946, 2
        %v2003 = vsel %vm1430, %v2001, %v2002
        %v2004 = vrot.slane %v1947, 2
        %v2005 = vsel %vm1430, %v2002, %v2004
        %v2006 = vrot.slane %v1948, 2
        %v2007 = vrot.slane %v1949, 2
        %v2008 = vsel %vm1430, %v2006, %v2007
        %v2009 = vrot.slane %v1950, 2
        %v2010 = vsel %vm1430, %v2007, %v2009
        %v2011 = vrot.slane %v1951, 2
        %v2012 = vrot.slane %v1952, 2
        %v2013 = vsel %vm1430, %v2011, %v2012
        %v2014 = vrot.slane %v1953, 2
        %v2015 = vsel %vm1430, %v2012, %v2014
        %v2016 = vrot.slane %v1954, 2
        %v2017 = vrot.slane %v1955, 2
        %v2018 = vsel %vm1430, %v2016, %v2017
        %v2019 = vrot.slane %v1956, 2
        %v2020 = vsel %vm1430, %v2017, %v2019
        %v2037 = vadd.f32 %v1916, %v1983
        %v2038 = vadd.f32 %v1917, %v1985
        %v2039 = vadd.f32 %v1918, %v1988
        %v2040 = vadd.f32 %v1919, %v1990
        %v2041 = vadd.f32 %v1920, %v1993
        %v2042 = vadd.f32 %v1921, %v1995
        %v2043 = vadd.f32 %v1922, %v1998
        %v2044 = vadd.f32 %v1923, %v2000
        %v2045 = vadd.f32 %v1924, %v2003
        %v2046 = vadd.f32 %v1925, %v2005
        %v2047 = vadd.f32 %v1926, %v2008
        %v2048 = vadd.f32 %v1927, %v2010
        %v2049 = vadd.f32 %v1928, %v2013
        %v2050 = vadd.f32 %v1929, %v2015
        %v2051 = vadd.f32 %v1930, %v2018
        %v2052 = vadd.f32 %v1931, %v2020
        %v2053 = vld [vmem:[%s4] sm:$0x1]
        %v2055 = vperm.slane %v2053, 0
        %v2057 = vadd.f32 %v2037, %v2055
        %v2058 = vadd.f32 %v2038, %v2055
        %v2059 = vadd.f32 %v2039, %v2055
        %v2060 = vadd.f32 %v2040, %v2055
        %v2061 = vadd.f32 %v2041, %v2055
        %v2062 = vadd.f32 %v2042, %v2055
        %v2063 = vadd.f32 %v2043, %v2055
        %v2064 = vadd.f32 %v2044, %v2055
        %v2065 = vadd.f32 %v2045, %v2055
        %v2066 = vadd.f32 %v2046, %v2055
        %v2067 = vadd.f32 %v2047, %v2055
        %v2068 = vadd.f32 %v2048, %v2055
        %v2069 = vadd.f32 %v2049, %v2055
        %v2070 = vadd.f32 %v2050, %v2055
        %v2071 = vadd.f32 %v2051, %v2055
        %v2072 = vadd.f32 %v2052, %v2055
        %v2073 = vmax.f32 %v2057, 0.0
        %v2074 = vmax.f32 %v2058, 0.0
        %v2075 = vmax.f32 %v2059, 0.0
        %v2076 = vmax.f32 %v2060, 0.0
        %v2077 = vmax.f32 %v2061, 0.0
        %v2078 = vmax.f32 %v2062, 0.0
        %v2079 = vmax.f32 %v2063, 0.0
        %v2080 = vmax.f32 %v2064, 0.0
        %v2081 = vmax.f32 %v2065, 0.0
        %v2082 = vmax.f32 %v2066, 0.0
        %v2083 = vmax.f32 %v2067, 0.0
        %v2084 = vmax.f32 %v2068, 0.0
        %v2085 = vmax.f32 %v2069, 0.0
        %v2086 = vmax.f32 %v2070, 0.0
        %v2087 = vmax.f32 %v2071, 0.0
        %v2088 = vmax.f32 %v2072, 0.0
        %v2089 = vmin.f32 %v2073, 6.0
        %v2090 = vmin.f32 %v2074, 6.0
        %v2091 = vmin.f32 %v2075, 6.0
        %v2092 = vmin.f32 %v2076, 6.0
        %v2093 = vmin.f32 %v2077, 6.0
        %v2094 = vmin.f32 %v2078, 6.0
        %v2095 = vmin.f32 %v2079, 6.0
        %v2096 = vmin.f32 %v2080, 6.0
        %v2097 = vmin.f32 %v2081, 6.0
        %v2098 = vmin.f32 %v2082, 6.0
        %v2099 = vmin.f32 %v2083, 6.0
        %v2100 = vmin.f32 %v2084, 6.0
        %v2101 = vmin.f32 %v2085, 6.0
        %v2102 = vmin.f32 %v2086, 6.0
        %v2103 = vmin.f32 %v2087, 6.0
        %v2104 = vmin.f32 %v2088, 6.0
        %v2105 = vld [vmem:[%s5] sm:$0xff]
        %v2106 = vld [vmem:[%s6] sm:$0xff]
        %2108 = vset.pattern.permute.xlu0 0
        %2109 = vperm.xlu0 %2108, %v2106
        %v2110 = vpop.permute.xlu0 %2109
        %vm2112 = vcmask 261120
        %v2114 = vsel %vm2112, %v2105, 0
        %v2117 = vsel %vm2112, %v2089, 0
        %v2120 = vsel %vm2112, %v2090, 0
        %v2123 = vsel %vm2112, %v2091, 0
        %v2126 = vsel %vm2112, %v2092, 0
        %v2129 = vsel %vm2112, %v2093, 0
        %v2132 = vsel %vm2112, %v2094, 0
        %v2135 = vsel %vm2112, %v2095, 0
        %v2138 = vsel %vm2112, %v2096, 0
        %v2141 = vsel %vm2112, %v2097, 0
        %v2144 = vsel %vm2112, %v2098, 0
        %v2147 = vsel %vm2112, %v2099, 0
        %v2150 = vsel %vm2112, %v2100, 0
        %v2153 = vsel %vm2112, %v2101, 0
        %v2156 = vsel %vm2112, %v2102, 0
        %v2159 = vsel %vm2112, %v2103, 0
        %v2162 = vsel %vm2112, %v2104, 0
        %2164 = vmatpush.xpose.msra.mxu0 %v2162
        %2165 = vmatpush.xpose.msra.mxu0 %v2159
        %2166 = vmatpush.xpose.msra.mxu0 %v2156
        %2167 = vmatpush.xpose.msra.mxu0 %v2153
        %2168 = vmatpush.xpose.msra.mxu0 %v2150
        %2169 = vmatpush.xpose.msra.mxu0 %v2147
        %2170 = vmatpush.xpose.msra.mxu0 %v2144
        %2171 = vmatpush.xpose.msra.mxu0 %v2141
        %2172 = vmatpush.xpose.msra.mxu0 %v2138
        %2173 = vmatpush.xpose.msra.mxu0 %v2135
        %2174 = vmatpush.xpose.msra.mxu0 %v2132
        %2175 = vmatpush.xpose.msra.mxu0 %v2129
        %2176 = vmatpush.xpose.msra.mxu0 %v2126
        %2177 = vmatpush.xpose.msra.mxu0 %v2123
        %2178 = vmatpush.xpose.msra.mxu0 %v2120
        %2179 = vmatpush.xpose.msra.mxu0 %v2117
        %2180 = vmatmul.f32.gmra.mxu0 %v2114
        %v2181 = vpop.f32.mrf.mxu0
        %v2182 = vadd.f32 %v2110, %v2181
        %2183 = vdwg.mxu0
        %v2184 = vld [vmem:[%s348] sm:$0xff]
        %v2185 = vadd.f32 %v2182, %v2184
        %2186 = vst [vmem:[%s335] sm:$0xff] %v2185
        %s2187 = sand.u32 %s224, 1
        %s2188 = scalar_lea.sflag [#allocation3], %s2187
        %s2189 = sand.u32 %s224, 1
        %s2190 = smul.addr %s2189, 8
        %s2191 = scalar_lea.vmem [#allocation2], %s2190
        // Predicated region
        $region53: #{tpu_custom_call.1} parent=51 // pred_check
          %p2192 = pneg %p234
        $region54: #{tpu_custom_call.1} parent=51 // pred_check_branch
          %2194 = sbr.rel (%p2192) target = $region56
        $region55: #{tpu_custom_call.1} parent=51 // pred_region
          %2196 = vsyncadd %s2188, 0
          %s2197 = smul.addr %s26, 2
          %s2198 = sadd.s32 %s27, %s2197
          %s2199 = smul.addr %s2198, 8
          %s2200 = scalar_lea.hbm %s8, %s2199
          %s2202 = sshll.u32 %s2191, 4
          %s2203 = int_to_ptr.vmem [resolvable:$true] %s2202
          %s2204 = sshll.u32 %s2200, 4
          %s2205 = int_to_ptr.hbm [resolvable:$true] %s2204
          %2207 = dma.vmem_to_hbm [thread:$0]  %s2203, 128, %s2205, %s2188
        $region56: #{tpu_custom_call.1} parent=51 // pred_fallthru
          _
      $region52: #{tpu_custom_call.1} parent=5 // pred_fallthru
        _
      %p2208 = scmp.le.s32.totalorder 2, %s17
      // Predicated region
      $region57: #{tpu_custom_call.1} parent=5 // pred_check
        %p2209 = pneg %p2208
      $region58: #{tpu_custom_call.1} parent=5 // pred_check_branch
        %2211 = sbr.rel (%p2209) target = $region60
      $region59: #{tpu_custom_call.1} parent=5 // pred_region
        %s2212 = ssub.s32 %s17, 2
        // Predicated region
        $region61: #{tpu_custom_call.1} parent=59 // pred_check
          %p2213 = pneg %p240
        $region62: #{tpu_custom_call.1} parent=59 // pred_check_branch
          %2215 = sbr.rel (%p2213) target = $region64
        $region63: #{tpu_custom_call.1} parent=59 // pred_region
          %s2216 = sand.u32 %s225, 1
          %s2217 = scalar_lea.sflag [#allocation3], %s2216
          %s2218 = sand.u32 %s225, 1
          %s2219 = smul.addr %s2218, 8
          %s2220 = scalar_lea.vmem [#allocation2], %s2219
          %2222 = dma.done %s2217, 128
        $region64: #{tpu_custom_call.1} parent=59 // pred_fallthru
          _
      $region60: #{tpu_custom_call.1} parent=5 // pred_fallthru
        _
    $region6: #{tpu_custom_call.1} parent=1 // loop_footer
      %s21 = sadd.s32 1, %s17
    $region7: #{tpu_custom_call.1} parent=1 // loop_footer_branch
      %16 = sbr.rel target = $region3
    $region8: #{tpu_custom_call.1} parent=1 // loop_exit
      _
    %2223 = vsyncpa [#allocation3], 1
    %s2224 = scalar_lea.sflag [#allocation3], 1
    %2225 = vsyncpa %s2224, 1

</llo_original>
